<compile_context>
chip_gen: v7x
topology: tpu7x:2x2x1
jax: 0.10.0
libtpu: 0.0.40
codegen_flags: <defaults>
</compile_context>

<pallas_src>
import jax
import jax.numpy as jnp
from jax.experimental import pallas as pl
from jax.experimental.pallas import tpu as pltpu

IN_FEATURES = 194
PADDED_IN = 256          # 194 zero-padded up to a multiple of 128
HIDDEN = (1024, 512, 128)
OUT_FEATURES = 2


def _round_up(x, m):
    return ((x + m - 1) // m) * m


def ffnn_kernel(x_ref,
                w1_ref, b1_ref,
                w2_ref, b2_ref,
                w3_ref, b3_ref,
                w4_ref, b4_ref,
                o_ref):
    # Layer 1: Linear(194 -> 1024) + ReLU   (dropout = identity in eval mode)
    # x_ref / w*_ref are bf16; accumulate in f32 on the MXU.
    h = jnp.dot(x_ref[...], w1_ref[...], preferred_element_type=jnp.float32)
    h = jnp.maximum(h + b1_ref[...], 0.0)

    # Layer 2: Linear(1024 -> 512) + ReLU
    h = jnp.dot(h.astype(jnp.bfloat16), w2_ref[...],
                preferred_element_type=jnp.float32)
    h = jnp.maximum(h + b2_ref[...], 0.0)

    # Layer 3: Linear(512 -> 128) + ReLU
    h = jnp.dot(h.astype(jnp.bfloat16), w3_ref[...],
                preferred_element_type=jnp.float32)
    h = jnp.maximum(h + b3_ref[...], 0.0)

    # Layer 4: Linear(128 -> 2) + Sigmoid
    logits = jnp.dot(h.astype(jnp.bfloat16), w4_ref[...],
                     preferred_element_type=jnp.float32) + b4_ref[...]
    o_ref[...] = jax.nn.sigmoid(logits)


def ffnn_forward(x, params, *, block_b=512):
    """x: [B, 194] float32.  params: dict of (w [in,out] f32, b [1,out] f32)."""
    B, fin = x.shape
    assert fin == IN_FEATURES, fin

    # Batch tile: multiple of 8 (sublane), capped at block_b (multiple of 128/256
    # so the MXU stays fully fed on v5e and v6e/v7x alike).
    TB = min(block_b, _round_up(B, 8))
    Bp = _round_up(B, TB)
    n_tiles = Bp // TB

    # --- pad + cast inputs / weights (zero padding is numerically a no-op) ---
    xp = jnp.zeros((Bp, PADDED_IN), jnp.bfloat16)
    xp = xp.at[:B, :IN_FEATURES].set(x.astype(jnp.bfloat16))

    w1, b1 = params["l1"]
    w2, b2 = params["l2"]
    w3, b3 = params["l3"]
    w4, b4 = params["l4"]

    w1p = jnp.zeros((PADDED_IN, HIDDEN[0]), jnp.bfloat16)
    w1p = w1p.at[:IN_FEATURES, :].set(w1.astype(jnp.bfloat16))
    w2p = w2.astype(jnp.bfloat16)
    w3p = w3.astype(jnp.bfloat16)
    w4p = w4.astype(jnp.bfloat16)
    b1f, b2f, b3f, b4f = (b.astype(jnp.float32) for b in (b1, b2, b3, b4))

    # --- BlockSpecs ---
    x_spec = pl.BlockSpec((TB, PADDED_IN), lambda i: (i, 0))
    # Weights/biases: same block for every grid step -> stay resident in VMEM.
    const = lambda a: pl.BlockSpec(a.shape, lambda i: (0,) * a.ndim)
    out_spec = pl.BlockSpec((TB, OUT_FEATURES), lambda i: (i, 0))

    flops = 2 * B * (IN_FEATURES * HIDDEN[0]
                     + HIDDEN[0] * HIDDEN[1]
                     + HIDDEN[1] * HIDDEN[2]
                     + HIDDEN[2] * OUT_FEATURES)
    weight_bytes = 2 * (PADDED_IN * HIDDEN[0] + HIDDEN[0] * HIDDEN[1]
                        + HIDDEN[1] * HIDDEN[2] + HIDDEN[2] * OUT_FEATURES)
    bytes_accessed = (Bp * PADDED_IN * 2            # x (bf16)
                      + weight_bytes                # weights (bf16)
                      + 4 * sum(HIDDEN) + 4 * OUT_FEATURES   # biases (f32)
                      + Bp * OUT_FEATURES * 4)      # output (f32)

    out = pl.pallas_call(
        ffnn_kernel,
        out_shape=jax.ShapeDtypeStruct((Bp, OUT_FEATURES), jnp.float32),
        grid=(n_tiles,),
        in_specs=[x_spec,
                  const(w1p), const(b1f),
                  const(w2p), const(b2f),
                  const(w3p), const(b3f),
                  const(w4p), const(b4f)],
        out_specs=out_spec,
        compiler_params=pltpu.CompilerParams(
            dimension_semantics=("parallel",),   # shard batch tiles across TCs (v7x)
            vmem_limit_bytes=16 << 20,           # actual footprint ~4 MiB; v7x-safe
        ),
        cost_estimate=pl.CostEstimate(
            flops=flops,
            transcendentals=B * OUT_FEATURES,    # sigmoid
            bytes_accessed=bytes_accessed,
        ),
    )(xp, w1p, b1f, w2p, b2f, w3p, b3f, w4p, b4f)

    return out[:B]


def init_params(key):
    """Deterministic init mimicking nn.Linear's uniform(-1/sqrt(fan_in), +)."""
    dims = [(IN_FEATURES, HIDDEN[0]), (HIDDEN[0], HIDDEN[1]),
            (HIDDEN[1], HIDDEN[2]), (HIDDEN[2], OUT_FEATURES)]
    names = ["l1", "l2", "l3", "l4"]
    params = {}
    for name, (fin, fout) in zip(names, dims):
        key, kw, kb = jax.random.split(key, 3)
        bound = 1.0 / (fin ** 0.5)
        w = jax.random.uniform(kw, (fin, fout), jnp.float32, -bound, bound)
        b = jax.random.uniform(kb, (1, fout), jnp.float32, -bound, bound)
        params[name] = (w, b)
    return params


def reference_forward(x, params):
    """Pure-JAX reference using the same bf16-weight / f32-accumulate recipe."""
    h = x.astype(jnp.bfloat16)
    for name in ["l1", "l2", "l3"]:
        w, b = params[name]
        h = jnp.dot(h, w.astype(jnp.bfloat16),
                    preferred_element_type=jnp.float32) + b
        h = jnp.maximum(h, 0.0).astype(jnp.bfloat16)
    w, b = params["l4"]
    logits = jnp.dot(h, w.astype(jnp.bfloat16),
                     preferred_element_type=jnp.float32) + b
    return jax.nn.sigmoid(logits)


if __name__ == "__main__":
    key = jax.random.PRNGKey(0)
    key, kx = jax.random.split(key)

    B = 8
    x = jax.random.normal(kx, (B, IN_FEATURES), dtype=jnp.float32)
    params = init_params(key)

    out = ffnn_forward(x, params)
    out = jax.block_until_ready(out)

    ref = reference_forward(x, params)
    assert out.shape == (B, OUT_FEATURES), out.shape
    assert jnp.allclose(out, ref, atol=2e-3, rtol=2e-3), "mismatch vs JAX reference"

    print("KERNEL_OK")
</pallas_src>

<mosaic_0001>
module attributes {stable_mosaic.version = 11 : i64} {
  func.func @ffnn_kernel(%arg0: i32, %arg1: memref<8x256xbf16, #tpu.memory_space<vmem>>, %arg2: memref<256x1024xbf16, #tpu.memory_space<vmem>>, %arg3: memref<1x1024xf32, #tpu.memory_space<vmem>>, %arg4: memref<1024x512xbf16, #tpu.memory_space<vmem>>, %arg5: memref<1x512xf32, #tpu.memory_space<vmem>>, %arg6: memref<512x128xbf16, #tpu.memory_space<vmem>>, %arg7: memref<1x128xf32, #tpu.memory_space<vmem>>, %arg8: memref<128x2xbf16, #tpu.memory_space<vmem>>, %arg9: memref<1x2xf32, #tpu.memory_space<vmem>>, %arg10: memref<8x2xf32, #tpu.memory_space<vmem>>) attributes {dimension_semantics = [#tpu.dimension_semantics<parallel>], iteration_bounds = array<i64: 1>, scalar_prefetch = 0 : i64, scratch_operands = 0 : i64, tpu.core_type = #tpu.core_type<tc>, window_params = [{transform_indices = @transform_0, window_bounds = array<i64: 8, 256>}, {pipeline_mode = #tpu.pipeline_mode<synchronous>, transform_indices = @transform_1, window_bounds = array<i64: 256, 1024>}, {pipeline_mode = #tpu.pipeline_mode<synchronous>, transform_indices = @transform_2, window_bounds = array<i64: 1, 1024>}, {pipeline_mode = #tpu.pipeline_mode<synchronous>, transform_indices = @transform_3, window_bounds = array<i64: 1024, 512>}, {pipeline_mode = #tpu.pipeline_mode<synchronous>, transform_indices = @transform_4, window_bounds = array<i64: 1, 512>}, {pipeline_mode = #tpu.pipeline_mode<synchronous>, transform_indices = @transform_5, window_bounds = array<i64: 512, 128>}, {pipeline_mode = #tpu.pipeline_mode<synchronous>, transform_indices = @transform_6, window_bounds = array<i64: 1, 128>}, {pipeline_mode = #tpu.pipeline_mode<synchronous>, transform_indices = @transform_7, window_bounds = array<i64: 128, 2>}, {pipeline_mode = #tpu.pipeline_mode<synchronous>, transform_indices = @transform_8, window_bounds = array<i64: 1, 2>}, {transform_indices = @transform_9, window_bounds = array<i64: 8, 2>}]} {
    %c0 = arith.constant 0 : index
    %c0_0 = arith.constant 0 : index
    %0 = vector.load %arg1[%c0, %c0_0] : memref<8x256xbf16, #tpu.memory_space<vmem>>, vector<8x256xbf16>
    %c0_1 = arith.constant 0 : index
    %c0_2 = arith.constant 0 : index
    %1 = vector.load %arg2[%c0_1, %c0_2] : memref<256x1024xbf16, #tpu.memory_space<vmem>>, vector<256x1024xbf16>
    %cst = arith.constant dense<0.000000e+00> : vector<8x1024xf32>
    %2 = tpu.matmul %0, %1, %cst {dimension_numbers = #tpu.dot_dimension_numbers<[1], [0], [0], [1], [0, 0, 1, 1], [], []>} : vector<8x256xbf16>, vector<256x1024xbf16>, vector<8x1024xf32> -> vector<8x1024xf32>
    %c0_3 = arith.constant 0 : index
    %c0_4 = arith.constant 0 : index
    %3 = vector.load %arg3[%c0_3, %c0_4] : memref<1x1024xf32, #tpu.memory_space<vmem>>, vector<1x1024xf32>
    %4 = vector.broadcast %3 : vector<1x1024xf32> to vector<8x1024xf32>
    %5 = arith.addf %2, %4 : vector<8x1024xf32>
    %cst_5 = arith.constant 0.000000e+00 : f32
    %6 = vector.broadcast %cst_5 : f32 to vector<8x1024xf32>
    %7 = arith.maximumf %5, %6 : vector<8x1024xf32>
    %8 = arith.truncf %7 : vector<8x1024xf32> to vector<8x1024xbf16>
    %c0_6 = arith.constant 0 : index
    %c0_7 = arith.constant 0 : index
    %9 = vector.load %arg4[%c0_6, %c0_7] : memref<1024x512xbf16, #tpu.memory_space<vmem>>, vector<1024x512xbf16>
    %cst_8 = arith.constant dense<0.000000e+00> : vector<8x512xf32>
    %10 = tpu.matmul %8, %9, %cst_8 {dimension_numbers = #tpu.dot_dimension_numbers<[1], [0], [0], [1], [0, 0, 1, 1], [], []>} : vector<8x1024xbf16>, vector<1024x512xbf16>, vector<8x512xf32> -> vector<8x512xf32>
    %c0_9 = arith.constant 0 : index
    %c0_10 = arith.constant 0 : index
    %11 = vector.load %arg5[%c0_9, %c0_10] : memref<1x512xf32, #tpu.memory_space<vmem>>, vector<1x512xf32>
    %12 = vector.broadcast %11 : vector<1x512xf32> to vector<8x512xf32>
    %13 = arith.addf %10, %12 : vector<8x512xf32>
    %cst_11 = arith.constant 0.000000e+00 : f32
    %14 = vector.broadcast %cst_11 : f32 to vector<8x512xf32>
    %15 = arith.maximumf %13, %14 : vector<8x512xf32>
    %16 = arith.truncf %15 : vector<8x512xf32> to vector<8x512xbf16>
    %c0_12 = arith.constant 0 : index
    %c0_13 = arith.constant 0 : index
    %17 = vector.load %arg6[%c0_12, %c0_13] : memref<512x128xbf16, #tpu.memory_space<vmem>>, vector<512x128xbf16>
    %cst_14 = arith.constant dense<0.000000e+00> : vector<8x128xf32>
    %18 = tpu.matmul %16, %17, %cst_14 {dimension_numbers = #tpu.dot_dimension_numbers<[1], [0], [0], [1], [0, 0, 1, 1], [], []>} : vector<8x512xbf16>, vector<512x128xbf16>, vector<8x128xf32> -> vector<8x128xf32>
    %c0_15 = arith.constant 0 : index
    %c0_16 = arith.constant 0 : index
    %19 = vector.load %arg7[%c0_15, %c0_16] : memref<1x128xf32, #tpu.memory_space<vmem>>, vector<1x128xf32>
    %20 = vector.broadcast %19 : vector<1x128xf32> to vector<8x128xf32>
    %21 = arith.addf %18, %20 : vector<8x128xf32>
    %cst_17 = arith.constant 0.000000e+00 : f32
    %22 = vector.broadcast %cst_17 : f32 to vector<8x128xf32>
    %23 = arith.maximumf %21, %22 : vector<8x128xf32>
    %24 = arith.truncf %23 : vector<8x128xf32> to vector<8x128xbf16>
    %c0_18 = arith.constant 0 : index
    %c0_19 = arith.constant 0 : index
    %25 = vector.load %arg8[%c0_18, %c0_19] : memref<128x2xbf16, #tpu.memory_space<vmem>>, vector<128x2xbf16>
    %cst_20 = arith.constant dense<0.000000e+00> : vector<8x2xf32>
    %26 = tpu.matmul %24, %25, %cst_20 {dimension_numbers = #tpu.dot_dimension_numbers<[1], [0], [0], [1], [0, 0, 1, 1], [], []>} : vector<8x128xbf16>, vector<128x2xbf16>, vector<8x2xf32> -> vector<8x2xf32>
    %c0_21 = arith.constant 0 : index
    %c0_22 = arith.constant 0 : index
    %27 = vector.load %arg9[%c0_21, %c0_22] : memref<1x2xf32, #tpu.memory_space<vmem>>, vector<1x2xf32>
    %28 = vector.broadcast %27 : vector<1x2xf32> to vector<8x2xf32>
    %29 = arith.addf %26, %28 : vector<8x2xf32>
    %30 = arith.negf %29 : vector<8x2xf32>
    %31 = math.exp %30 : vector<8x2xf32>
    %cst_23 = arith.constant 1.000000e+00 : f32
    %32 = vector.broadcast %cst_23 : f32 to vector<8x2xf32>
    %33 = arith.addf %32, %31 : vector<8x2xf32>
    %34 = arith.divf %32, %33 : vector<8x2xf32>
    %c0_24 = arith.constant 0 : index
    %c0_25 = arith.constant 0 : index
    %35 = vector.load %arg10[%c0_24, %c0_25] : memref<8x2xf32, #tpu.memory_space<vmem>>, vector<8x2xf32>
    tpu.vector_store %arg10[%c0_24, %c0_25], %34 {strides = array<i32>} : memref<8x2xf32, #tpu.memory_space<vmem>>, vector<8x2xf32>,
    return
  }
  func.func @transform_0(%arg0: i32) -> (i32, i32) {
    %c0_i32 = arith.constant 0 : i32
    %c0_i32_0 = arith.constant 0 : i32
    return %arg0, %c0_i32 : i32, i32
  }
  func.func @transform_1(%arg0: i32) -> (i32, i32) {
    %c0_i32 = arith.constant 0 : i32
    %c0_i32_0 = arith.constant 0 : i32
    %c0_i32_1 = arith.constant 0 : i32
    return %c0_i32, %c0_i32_0 : i32, i32
  }
  func.func @transform_2(%arg0: i32) -> (i32, i32) {
    %c0_i32 = arith.constant 0 : i32
    %c0_i32_0 = arith.constant 0 : i32
    %c0_i32_1 = arith.constant 0 : i32
    return %c0_i32, %c0_i32_0 : i32, i32
  }
  func.func @transform_3(%arg0: i32) -> (i32, i32) {
    %c0_i32 = arith.constant 0 : i32
    %c0_i32_0 = arith.constant 0 : i32
    %c0_i32_1 = arith.constant 0 : i32
    return %c0_i32, %c0_i32_0 : i32, i32
  }
  func.func @transform_4(%arg0: i32) -> (i32, i32) {
    %c0_i32 = arith.constant 0 : i32
    %c0_i32_0 = arith.constant 0 : i32
    %c0_i32_1 = arith.constant 0 : i32
    return %c0_i32, %c0_i32_0 : i32, i32
  }
  func.func @transform_5(%arg0: i32) -> (i32, i32) {
    %c0_i32 = arith.constant 0 : i32
    %c0_i32_0 = arith.constant 0 : i32
    %c0_i32_1 = arith.constant 0 : i32
    return %c0_i32, %c0_i32_0 : i32, i32
  }
  func.func @transform_6(%arg0: i32) -> (i32, i32) {
    %c0_i32 = arith.constant 0 : i32
    %c0_i32_0 = arith.constant 0 : i32
    %c0_i32_1 = arith.constant 0 : i32
    return %c0_i32, %c0_i32_0 : i32, i32
  }
  func.func @transform_7(%arg0: i32) -> (i32, i32) {
    %c0_i32 = arith.constant 0 : i32
    %c0_i32_0 = arith.constant 0 : i32
    %c0_i32_1 = arith.constant 0 : i32
    return %c0_i32, %c0_i32_0 : i32, i32
  }
  func.func @transform_8(%arg0: i32) -> (i32, i32) {
    %c0_i32 = arith.constant 0 : i32
    %c0_i32_0 = arith.constant 0 : i32
    %c0_i32_1 = arith.constant 0 : i32
    return %c0_i32, %c0_i32_0 : i32, i32
  }
  func.func @transform_9(%arg0: i32) -> (i32, i32) {
    %c0_i32 = arith.constant 0 : i32
    %c0_i32_0 = arith.constant 0 : i32
    return %arg0, %c0_i32 : i32, i32
  }
}

</mosaic_0001>

<llo_original>
// kernel: tpu_custom_call.1
$region0: #{tpu_custom_call.1}
  #allocation0 [shape = 'u32[]', space=smem, size = 0x4, offset = 0x4, fixed_abs, tag = 'smem constant byte address 0x4 - core index']
  #allocation1 [shape = 'u32[144,128]{1,0:T(1,128)}', space=vmem, size = 0x12000, scoped, tag = 'internal scratch']
  %s0 = inlined_call_operand.vmem [shape: bf16[8,256], index: 0, kind: input, shape index: {}]
  %s1 = inlined_call_operand.hbm [shape: bf16[256,1024], index: 1, kind: input, shape index: {}]
  %s2 = inlined_call_operand.vmem [shape: f32[1,1024], index: 2, kind: input, shape index: {}]
  %s3 = inlined_call_operand.hbm [shape: bf16[1024,512], index: 3, kind: input, shape index: {}]
  %s4 = inlined_call_operand.vmem [shape: f32[1,512], index: 4, kind: input, shape index: {}]
  %s5 = inlined_call_operand.hbm [shape: bf16[512,128], index: 5, kind: input, shape index: {}]
  %s6 = inlined_call_operand.vmem [shape: f32[1,128], index: 6, kind: input, shape index: {}]
  %s7 = inlined_call_operand.vmem [shape: bf16[128,2], index: 7, kind: input, shape index: {}]
  %s8 = inlined_call_operand.vmem [shape: f32[1,2], index: 8, kind: input, shape index: {}]
  %s9 = inlined_call_operand.vmem [shape: f32[8,2], index: 9, kind: output, shape index: {}]
  %s10 = sld [smem:[#allocation0]]
  $region58: #{tpu_custom_call.1} parent=0
    _
  %s12 = ssub.s32 1, %s10
  %s13 = scalar_select 0, %s12, %s10
  $region1: #{tpu_custom_call.1} parent=0
    #allocation2 [shape = 'u8[524288]{0}', space=vmem, size = 0x80000, scoped, tag = 'input window, operand 1, single buffered']
    #allocation3 [shape = 's32[1]{0}', space=sflag, size = 0x4, scoped, tag = 'scoped memory for tpu_custom_call.1']
    #allocation4 [shape = 'u8[1048576]{0}', space=vmem, size = 0x100000, scoped, tag = 'input window, operand 3, single buffered']
    #allocation5 [shape = 's32[1]{0}', space=sflag, size = 0x4, scoped, tag = 'scoped memory for tpu_custom_call.1']
    #allocation6 [shape = 'u8[131072]{0}', space=vmem, size = 0x20000, scoped, tag = 'input window, operand 5, single buffered']
    %14 = vsyncpa [#allocation3], 0
    %15 = vsyncpa [#allocation5], 0
    // Predicated region
    $region2: #{tpu_custom_call.1} parent=1 // pred_check
      _
    $region3: #{tpu_custom_call.1} parent=1 // pred_check_branch
      %17 = sbr.rel (0) target = $region5
    $region4: #{tpu_custom_call.1} parent=1 // pred_region
      _
    $region5: #{tpu_custom_call.1} parent=1 // pred_fallthru
      _
    // Predicated region
    $region6: #{tpu_custom_call.1} parent=1 // pred_check
      _
    $region7: #{tpu_custom_call.1} parent=1 // pred_check_branch
      %19 = sbr.rel (0) target = $region9
    $region8: #{tpu_custom_call.1} parent=1 // pred_region
      %s21 = ssub.s32 16384, 16384
      %22 = vsyncadd [#allocation3], %s21
      %s23 = sshll.u32 [#allocation2], 4
      %s24 = int_to_ptr.vmem [resolvable:$true] %s23
      %29 = dma.hbm_to_vmem [thread:$0]  %s1, 16384, %s24, [#allocation3], 512, 512, 32
    $region9: #{tpu_custom_call.1} parent=1 // pred_fallthru
      _
    // Predicated region
    $region10: #{tpu_custom_call.1} parent=1 // pred_check
      _
    $region11: #{tpu_custom_call.1} parent=1 // pred_check_branch
      %31 = sbr.rel (0) target = $region13
    $region12: #{tpu_custom_call.1} parent=1 // pred_region
      _
    $region13: #{tpu_custom_call.1} parent=1 // pred_fallthru
      _
    // Predicated region
    $region14: #{tpu_custom_call.1} parent=1 // pred_check
      _
    $region15: #{tpu_custom_call.1} parent=1 // pred_check_branch
      %33 = sbr.rel (0) target = $region17
    $region16: #{tpu_custom_call.1} parent=1 // pred_region
      %s35 = ssub.s32 32768, 32768
      %36 = vsyncadd [#allocation5], %s35
      %s37 = sshll.u32 [#allocation4], 4
      %s38 = int_to_ptr.vmem [resolvable:$true] %s37
      %43 = dma.hbm_to_vmem [thread:$0]  %s3, 32768, %s38, [#allocation5], 256, 256, 16
    $region17: #{tpu_custom_call.1} parent=1 // pred_fallthru
      _
    // Predicated region
    $region18: #{tpu_custom_call.1} parent=1 // pred_check
      _
    $region19: #{tpu_custom_call.1} parent=1 // pred_check_branch
      %45 = sbr.rel (0) target = $region21
    $region20: #{tpu_custom_call.1} parent=1 // pred_region
      _
    $region21: #{tpu_custom_call.1} parent=1 // pred_fallthru
      _
    // Predicated region
    $region22: #{tpu_custom_call.1} parent=1 // pred_check
      _
    $region23: #{tpu_custom_call.1} parent=1 // pred_check_branch
      %47 = sbr.rel (0) target = $region25
    $region24: #{tpu_custom_call.1} parent=1 // pred_region
      %s49 = ssub.s32 4096, 4096
      %50 = vsyncadd [#allocation5], %s49
      %s51 = sshll.u32 [#allocation6], 4
      %s52 = int_to_ptr.vmem [resolvable:$true] %s51
      %57 = dma.hbm_to_vmem [thread:$0]  %s5, 4096, %s52, [#allocation5], 64, 64, 4
    $region25: #{tpu_custom_call.1} parent=1 // pred_fallthru
      _
    // Predicated region
    $region26: #{tpu_custom_call.1} parent=1 // pred_check
      _
    $region27: #{tpu_custom_call.1} parent=1 // pred_check_branch
      %59 = sbr.rel (0) target = $region29
    $region28: #{tpu_custom_call.1} parent=1 // pred_region
      _
    $region29: #{tpu_custom_call.1} parent=1 // pred_fallthru
      _
    // Predicated region
    $region30: #{tpu_custom_call.1} parent=1 // pred_check
      _
    $region31: #{tpu_custom_call.1} parent=1 // pred_check_branch
      %61 = sbr.rel (0) target = $region33
    $region32: #{tpu_custom_call.1} parent=1 // pred_region
      _
    $region33: #{tpu_custom_call.1} parent=1 // pred_fallthru
      _
    // Predicated region
    $region34: #{tpu_custom_call.1} parent=1 // pred_check
      _
    $region35: #{tpu_custom_call.1} parent=1 // pred_check_branch
      %63 = sbr.rel (0) target = $region37
    $region36: #{tpu_custom_call.1} parent=1 // pred_region
      _
    $region37: #{tpu_custom_call.1} parent=1 // pred_fallthru
      _
    // Predicated region
    $region38: #{tpu_custom_call.1} parent=1 // pred_check
      _
    $region39: #{tpu_custom_call.1} parent=1 // pred_check_branch
      %65 = sbr.rel (0) target = $region41
    $region40: #{tpu_custom_call.1} parent=1 // pred_region
      %66 = dma.done [#allocation3], 16384
    $region41: #{tpu_custom_call.1} parent=1 // pred_fallthru
      _
    // Predicated region
    $region42: #{tpu_custom_call.1} parent=1 // pred_check
      _
    $region43: #{tpu_custom_call.1} parent=1 // pred_check_branch
      %68 = sbr.rel (0) target = $region45
    $region44: #{tpu_custom_call.1} parent=1 // pred_region
      %69 = dma.done [#allocation5], 32768
    $region45: #{tpu_custom_call.1} parent=1 // pred_fallthru
      _
    // Predicated region
    $region46: #{tpu_custom_call.1} parent=1 // pred_check
      _
    $region47: #{tpu_custom_call.1} parent=1 // pred_check_branch
      %71 = sbr.rel (0) target = $region49
    $region48: #{tpu_custom_call.1} parent=1 // pred_region
      %72 = dma.done [#allocation5], 4096
    $region49: #{tpu_custom_call.1} parent=1 // pred_fallthru
      _
    %v74 = vld [vmem:[%s0] sm:$0xff]
    %v75 = vld [vmem:[#allocation2] sm:$0xff]
    %v76 = vld [vmem:[#allocation2 + $0x8] sm:$0xff]
    %v77 = vld [vmem:[#allocation2 + $0x10] sm:$0xff]
    %v78 = vld [vmem:[#allocation2 + $0x18] sm:$0xff]
    %v79 = vld [vmem:[#allocation2 + $0x20] sm:$0xff]
    %v80 = vld [vmem:[#allocation2 + $0x28] sm:$0xff]
    %v81 = vld [vmem:[#allocation2 + $0x30] sm:$0xff]
    %v82 = vld [vmem:[#allocation2 + $0x38] sm:$0xff]
    %v83 = vld [vmem:[#allocation2 + $0x40] sm:$0xff]
    %v84 = vld [vmem:[#allocation2 + $0x48] sm:$0xff]
    %v85 = vld [vmem:[#allocation2 + $0x50] sm:$0xff]
    %v86 = vld [vmem:[#allocation2 + $0x58] sm:$0xff]
    %v87 = vld [vmem:[#allocation2 + $0x60] sm:$0xff]
    %v88 = vld [vmem:[#allocation2 + $0x68] sm:$0xff]
    %v89 = vld [vmem:[#allocation2 + $0x70] sm:$0xff]
    %v90 = vld [vmem:[#allocation2 + $0x78] sm:$0xff]
    %v91 = vld [vmem:[#allocation2 + $0x80] sm:$0xff]
    %v92 = vld [vmem:[#allocation2 + $0x88] sm:$0xff]
    %v93 = vld [vmem:[#allocation2 + $0x90] sm:$0xff]
    %v94 = vld [vmem:[#allocation2 + $0x98] sm:$0xff]
    %v95 = vld [vmem:[#allocation2 + $0xa0] sm:$0xff]
    %v96 = vld [vmem:[#allocation2 + $0xa8] sm:$0xff]
    %v97 = vld [vmem:[#allocation2 + $0xb0] sm:$0xff]
    %v98 = vld [vmem:[#allocation2 + $0xb8] sm:$0xff]
    %v99 = vld [vmem:[#allocation2 + $0xc0] sm:$0xff]
    %v100 = vld [vmem:[#allocation2 + $0xc8] sm:$0xff]
    %v101 = vld [vmem:[#allocation2 + $0xd0] sm:$0xff]
    %v102 = vld [vmem:[#allocation2 + $0xd8] sm:$0xff]
    %v103 = vld [vmem:[#allocation2 + $0xe0] sm:$0xff]
    %v104 = vld [vmem:[#allocation2 + $0xe8] sm:$0xff]
    %v105 = vld [vmem:[#allocation2 + $0xf0] sm:$0xff]
    %v106 = vld [vmem:[#allocation2 + $0xf8] sm:$0xff]
    %v107 = vld [vmem:[#allocation2 + $0x100] sm:$0xff]
    %v108 = vld [vmem:[#allocation2 + $0x108] sm:$0xff]
    %v109 = vld [vmem:[#allocation2 + $0x110] sm:$0xff]
    %v110 = vld [vmem:[#allocation2 + $0x118] sm:$0xff]
    %v111 = vld [vmem:[#allocation2 + $0x120] sm:$0xff]
    %v112 = vld [vmem:[#allocation2 + $0x128] sm:$0xff]
    %v113 = vld [vmem:[#allocation2 + $0x130] sm:$0xff]
    %v114 = vld [vmem:[#allocation2 + $0x138] sm:$0xff]
    %v115 = vld [vmem:[#allocation2 + $0x140] sm:$0xff]
    %v116 = vld [vmem:[#allocation2 + $0x148] sm:$0xff]
    %v117 = vld [vmem:[#allocation2 + $0x150] sm:$0xff]
    %v118 = vld [vmem:[#allocation2 + $0x158] sm:$0xff]
    %v119 = vld [vmem:[#allocation2 + $0x160] sm:$0xff]
    %v120 = vld [vmem:[#allocation2 + $0x168] sm:$0xff]
    %v121 = vld [vmem:[#allocation2 + $0x170] sm:$0xff]
    %v122 = vld [vmem:[#allocation2 + $0x178] sm:$0xff]
    %v123 = vld [vmem:[#allocation2 + $0x180] sm:$0xff]
    %v124 = vld [vmem:[#allocation2 + $0x188] sm:$0xff]
    %v125 = vld [vmem:[#allocation2 + $0x190] sm:$0xff]
    %v126 = vld [vmem:[#allocation2 + $0x198] sm:$0xff]
    %v127 = vld [vmem:[#allocation2 + $0x1a0] sm:$0xff]
    %v128 = vld [vmem:[#allocation2 + $0x1a8] sm:$0xff]
    %v129 = vld [vmem:[#allocation2 + $0x1b0] sm:$0xff]
    %v130 = vld [vmem:[#allocation2 + $0x1b8] sm:$0xff]
    %v131 = vld [vmem:[#allocation2 + $0x1c0] sm:$0xff]
    %v132 = vld [vmem:[#allocation2 + $0x1c8] sm:$0xff]
    %v133 = vld [vmem:[#allocation2 + $0x1d0] sm:$0xff]
    %v134 = vld [vmem:[#allocation2 + $0x1d8] sm:$0xff]
    %v135 = vld [vmem:[#allocation2 + $0x1e0] sm:$0xff]
    %v136 = vld [vmem:[#allocation2 + $0x1e8] sm:$0xff]
    %v137 = vld [vmem:[#allocation2 + $0x1f0] sm:$0xff]
    %v138 = vld [vmem:[#allocation2 + $0x1f8] sm:$0xff]
    %v139 = vld [vmem:[#allocation2 + $0x200] sm:$0xff]
    %v140 = vld [vmem:[#allocation2 + $0x208] sm:$0xff]
    %v141 = vld [vmem:[#allocation2 + $0x210] sm:$0xff]
    %v142 = vld [vmem:[#allocation2 + $0x218] sm:$0xff]
    %v143 = vld [vmem:[#allocation2 + $0x220] sm:$0xff]
    %v144 = vld [vmem:[#allocation2 + $0x228] sm:$0xff]
    %v145 = vld [vmem:[#allocation2 + $0x230] sm:$0xff]
    %v146 = vld [vmem:[#allocation2 + $0x238] sm:$0xff]
    %v147 = vld [vmem:[#allocation2 + $0x240] sm:$0xff]
    %v148 = vld [vmem:[#allocation2 + $0x248] sm:$0xff]
    %v149 = vld [vmem:[#allocation2 + $0x250] sm:$0xff]
    %v150 = vld [vmem:[#allocation2 + $0x258] sm:$0xff]
    %v151 = vld [vmem:[#allocation2 + $0x260] sm:$0xff]
    %v152 = vld [vmem:[#allocation2 + $0x268] sm:$0xff]
    %v153 = vld [vmem:[#allocation2 + $0x270] sm:$0xff]
    %v154 = vld [vmem:[#allocation2 + $0x278] sm:$0xff]
    %v155 = vld [vmem:[#allocation2 + $0x280] sm:$0xff]
    %v156 = vld [vmem:[#allocation2 + $0x288] sm:$0xff]
    %v157 = vld [vmem:[#allocation2 + $0x290] sm:$0xff]
    %v158 = vld [vmem:[#allocation2 + $0x298] sm:$0xff]
    %v159 = vld [vmem:[#allocation2 + $0x2a0] sm:$0xff]
    %v160 = vld [vmem:[#allocation2 + $0x2a8] sm:$0xff]
    %v161 = vld [vmem:[#allocation2 + $0x2b0] sm:$0xff]
    %v162 = vld [vmem:[#allocation2 + $0x2b8] sm:$0xff]
    %v163 = vld [vmem:[#allocation2 + $0x2c0] sm:$0xff]
    %v164 = vld [vmem:[#allocation2 + $0x2c8] sm:$0xff]
    %v165 = vld [vmem:[#allocation2 + $0x2d0] sm:$0xff]
    %v166 = vld [vmem:[#allocation2 + $0x2d8] sm:$0xff]
    %v167 = vld [vmem:[#allocation2 + $0x2e0] sm:$0xff]
    %v168 = vld [vmem:[#allocation2 + $0x2e8] sm:$0xff]
    %v169 = vld [vmem:[#allocation2 + $0x2f0] sm:$0xff]
    %v170 = vld [vmem:[#allocation2 + $0x2f8] sm:$0xff]
    %v171 = vld [vmem:[#allocation2 + $0x300] sm:$0xff]
    %v172 = vld [vmem:[#allocation2 + $0x308] sm:$0xff]
    %v173 = vld [vmem:[#allocation2 + $0x310] sm:$0xff]
    %v174 = vld [vmem:[#allocation2 + $0x318] sm:$0xff]
    %v175 = vld [vmem:[#allocation2 + $0x320] sm:$0xff]
    %v176 = vld [vmem:[#allocation2 + $0x328] sm:$0xff]
    %v177 = vld [vmem:[#allocation2 + $0x330] sm:$0xff]
    %v178 = vld [vmem:[#allocation2 + $0x338] sm:$0xff]
    %v179 = vld [vmem:[#allocation2 + $0x340] sm:$0xff]
    %v180 = vld [vmem:[#allocation2 + $0x348] sm:$0xff]
    %v181 = vld [vmem:[#allocation2 + $0x350] sm:$0xff]
    %v182 = vld [vmem:[#allocation2 + $0x358] sm:$0xff]
    %v183 = vld [vmem:[#allocation2 + $0x360] sm:$0xff]
    %v184 = vld [vmem:[#allocation2 + $0x368] sm:$0xff]
    %v185 = vld [vmem:[#allocation2 + $0x370] sm:$0xff]
    %v186 = vld [vmem:[#allocation2 + $0x378] sm:$0xff]
    %v187 = vld [vmem:[#allocation2 + $0x380] sm:$0xff]
    %v188 = vld [vmem:[#allocation2 + $0x388] sm:$0xff]
    %v189 = vld [vmem:[#allocation2 + $0x390] sm:$0xff]
    %v190 = vld [vmem:[#allocation2 + $0x398] sm:$0xff]
    %v191 = vld [vmem:[#allocation2 + $0x3a0] sm:$0xff]
    %v192 = vld [vmem:[#allocation2 + $0x3a8] sm:$0xff]
    %v193 = vld [vmem:[#allocation2 + $0x3b0] sm:$0xff]
    %v194 = vld [vmem:[#allocation2 + $0x3b8] sm:$0xff]
    %v195 = vld [vmem:[#allocation2 + $0x3c0] sm:$0xff]
    %v196 = vld [vmem:[#allocation2 + $0x3c8] sm:$0xff]
    %v197 = vld [vmem:[#allocation2 + $0x3d0] sm:$0xff]
    %v198 = vld [vmem:[#allocation2 + $0x3d8] sm:$0xff]
    %v199 = vld [vmem:[#allocation2 + $0x3e0] sm:$0xff]
    %v200 = vld [vmem:[#allocation2 + $0x3e8] sm:$0xff]
    %v201 = vld [vmem:[#allocation2 + $0x3f0] sm:$0xff]
    %v202 = vld [vmem:[#allocation2 + $0x3f8] sm:$0xff]
    %v203 = vld [vmem:[%s2] sm:$0xff]
    %v205 = vlaneseq
    %v206 = vshrl.u32 %v205, 7
    %v207 = vsub.s32 0, %v206
    %v208 = vrot.slane %v203, %v207
    %v209 = vlaneseq
    %v210 = vshrl.u32 %v209, 7
    %v211 = vsub.s32 1, %v210
    %v212 = vrot.slane %v203, %v211
    %v213 = vlaneseq
    %v214 = vshrl.u32 %v213, 7
    %v215 = vsub.s32 2, %v214
    %v216 = vrot.slane %v203, %v215
    %v217 = vlaneseq
    %v218 = vshrl.u32 %v217, 7
    %v219 = vsub.s32 3, %v218
    %v220 = vrot.slane %v203, %v219
    %v221 = vlaneseq
    %v222 = vshrl.u32 %v221, 7
    %v223 = vsub.s32 4, %v222
    %v224 = vrot.slane %v203, %v223
    %v225 = vlaneseq
    %v226 = vshrl.u32 %v225, 7
    %v227 = vsub.s32 5, %v226
    %v228 = vrot.slane %v203, %v227
    %v229 = vlaneseq
    %v230 = vshrl.u32 %v229, 7
    %v231 = vsub.s32 6, %v230
    %v232 = vrot.slane %v203, %v231
    %v233 = vlaneseq
    %v234 = vshrl.u32 %v233, 7
    %v235 = vsub.s32 7, %v234
    %v236 = vrot.slane %v203, %v235
    %v246 = vunpack.c.l.b16 %v74
    %v247 = vunpack.c.h.b16 %v74
    %v248 = vpack.c.b16 %v246, %v246
    %v249 = vpack.c.b16 %v247, %v247
    %v380 = vunpack.c.l.b16 %v75
    %v381 = vunpack.c.h.b16 %v75
    %v382 = vunpack.c.l.b16 %v76
    %v383 = vunpack.c.h.b16 %v76
    %v384 = vunpack.c.l.b16 %v77
    %v385 = vunpack.c.h.b16 %v77
    %v386 = vunpack.c.l.b16 %v78
    %v387 = vunpack.c.h.b16 %v78
    %v388 = vunpack.c.l.b16 %v79
    %v389 = vunpack.c.h.b16 %v79
    %v390 = vunpack.c.l.b16 %v80
    %v391 = vunpack.c.h.b16 %v80
    %v392 = vunpack.c.l.b16 %v81
    %v393 = vunpack.c.h.b16 %v81
    %v394 = vunpack.c.l.b16 %v82
    %v395 = vunpack.c.h.b16 %v82
    %v396 = vunpack.c.l.b16 %v83
    %v397 = vunpack.c.h.b16 %v83
    %v398 = vunpack.c.l.b16 %v84
    %v399 = vunpack.c.h.b16 %v84
    %v400 = vunpack.c.l.b16 %v85
    %v401 = vunpack.c.h.b16 %v85
    %v402 = vunpack.c.l.b16 %v86
    %v403 = vunpack.c.h.b16 %v86
    %v404 = vunpack.c.l.b16 %v87
    %v405 = vunpack.c.h.b16 %v87
    %v406 = vunpack.c.l.b16 %v88
    %v407 = vunpack.c.h.b16 %v88
    %v408 = vunpack.c.l.b16 %v89
    %v409 = vunpack.c.h.b16 %v89
    %v410 = vunpack.c.l.b16 %v90
    %v411 = vunpack.c.h.b16 %v90
    %v412 = vunpack.c.l.b16 %v91
    %v413 = vunpack.c.h.b16 %v91
    %v414 = vunpack.c.l.b16 %v92
    %v415 = vunpack.c.h.b16 %v92
    %v416 = vunpack.c.l.b16 %v93
    %v417 = vunpack.c.h.b16 %v93
    %v418 = vunpack.c.l.b16 %v94
    %v419 = vunpack.c.h.b16 %v94
    %v420 = vunpack.c.l.b16 %v95
    %v421 = vunpack.c.h.b16 %v95
    %v422 = vunpack.c.l.b16 %v96
    %v423 = vunpack.c.h.b16 %v96
    %v424 = vunpack.c.l.b16 %v97
    %v425 = vunpack.c.h.b16 %v97
    %v426 = vunpack.c.l.b16 %v98
    %v427 = vunpack.c.h.b16 %v98
    %v428 = vunpack.c.l.b16 %v99
    %v429 = vunpack.c.h.b16 %v99
    %v430 = vunpack.c.l.b16 %v100
    %v431 = vunpack.c.h.b16 %v100
    %v432 = vunpack.c.l.b16 %v101
    %v433 = vunpack.c.h.b16 %v101
    %v434 = vunpack.c.l.b16 %v102
    %v435 = vunpack.c.h.b16 %v102
    %v436 = vunpack.c.l.b16 %v103
    %v437 = vunpack.c.h.b16 %v103
    %v438 = vunpack.c.l.b16 %v104
    %v439 = vunpack.c.h.b16 %v104
    %v440 = vunpack.c.l.b16 %v105
    %v441 = vunpack.c.h.b16 %v105
    %v442 = vunpack.c.l.b16 %v106
    %v443 = vunpack.c.h.b16 %v106
    %v444 = vunpack.c.l.b16 %v107
    %v445 = vunpack.c.h.b16 %v107
    %v446 = vunpack.c.l.b16 %v108
    %v447 = vunpack.c.h.b16 %v108
    %v448 = vunpack.c.l.b16 %v109
    %v449 = vunpack.c.h.b16 %v109
    %v450 = vunpack.c.l.b16 %v110
    %v451 = vunpack.c.h.b16 %v110
    %v452 = vunpack.c.l.b16 %v111
    %v453 = vunpack.c.h.b16 %v111
    %v454 = vunpack.c.l.b16 %v112
    %v455 = vunpack.c.h.b16 %v112
    %v456 = vunpack.c.l.b16 %v113
    %v457 = vunpack.c.h.b16 %v113
    %v458 = vunpack.c.l.b16 %v114
    %v459 = vunpack.c.h.b16 %v114
    %v460 = vunpack.c.l.b16 %v115
    %v461 = vunpack.c.h.b16 %v115
    %v462 = vunpack.c.l.b16 %v116
    %v463 = vunpack.c.h.b16 %v116
    %v464 = vunpack.c.l.b16 %v117
    %v465 = vunpack.c.h.b16 %v117
    %v466 = vunpack.c.l.b16 %v118
    %v467 = vunpack.c.h.b16 %v118
    %v468 = vunpack.c.l.b16 %v119
    %v469 = vunpack.c.h.b16 %v119
    %v470 = vunpack.c.l.b16 %v120
    %v471 = vunpack.c.h.b16 %v120
    %v472 = vunpack.c.l.b16 %v121
    %v473 = vunpack.c.h.b16 %v121
    %v474 = vunpack.c.l.b16 %v122
    %v475 = vunpack.c.h.b16 %v122
    %v476 = vunpack.c.l.b16 %v123
    %v477 = vunpack.c.h.b16 %v123
    %v478 = vunpack.c.l.b16 %v124
    %v479 = vunpack.c.h.b16 %v124
    %v480 = vunpack.c.l.b16 %v125
    %v481 = vunpack.c.h.b16 %v125
    %v482 = vunpack.c.l.b16 %v126
    %v483 = vunpack.c.h.b16 %v126
    %v484 = vunpack.c.l.b16 %v127
    %v485 = vunpack.c.h.b16 %v127
    %v486 = vunpack.c.l.b16 %v128
    %v487 = vunpack.c.h.b16 %v128
    %v488 = vunpack.c.l.b16 %v129
    %v489 = vunpack.c.h.b16 %v129
    %v490 = vunpack.c.l.b16 %v130
    %v491 = vunpack.c.h.b16 %v130
    %v492 = vunpack.c.l.b16 %v131
    %v493 = vunpack.c.h.b16 %v131
    %v494 = vunpack.c.l.b16 %v132
    %v495 = vunpack.c.h.b16 %v132
    %v496 = vunpack.c.l.b16 %v133
    %v497 = vunpack.c.h.b16 %v133
    %v498 = vunpack.c.l.b16 %v134
    %v499 = vunpack.c.h.b16 %v134
    %v500 = vunpack.c.l.b16 %v135
    %v501 = vunpack.c.h.b16 %v135
    %v502 = vunpack.c.l.b16 %v136
    %v503 = vunpack.c.h.b16 %v136
    %v504 = vunpack.c.l.b16 %v137
    %v505 = vunpack.c.h.b16 %v137
    %v506 = vunpack.c.l.b16 %v138
    %v507 = vunpack.c.h.b16 %v138
    %v508 = vunpack.c.l.b16 %v139
    %v509 = vunpack.c.h.b16 %v139
    %v510 = vunpack.c.l.b16 %v140
    %v511 = vunpack.c.h.b16 %v140
    %v512 = vunpack.c.l.b16 %v141
    %v513 = vunpack.c.h.b16 %v141
    %v514 = vunpack.c.l.b16 %v142
    %v515 = vunpack.c.h.b16 %v142
    %v516 = vunpack.c.l.b16 %v143
    %v517 = vunpack.c.h.b16 %v143
    %v518 = vunpack.c.l.b16 %v144
    %v519 = vunpack.c.h.b16 %v144
    %v520 = vunpack.c.l.b16 %v145
    %v521 = vunpack.c.h.b16 %v145
    %v522 = vunpack.c.l.b16 %v146
    %v523 = vunpack.c.h.b16 %v146
    %v524 = vunpack.c.l.b16 %v147
    %v525 = vunpack.c.h.b16 %v147
    %v526 = vunpack.c.l.b16 %v148
    %v527 = vunpack.c.h.b16 %v148
    %v528 = vunpack.c.l.b16 %v149
    %v529 = vunpack.c.h.b16 %v149
    %v530 = vunpack.c.l.b16 %v150
    %v531 = vunpack.c.h.b16 %v150
    %v532 = vunpack.c.l.b16 %v151
    %v533 = vunpack.c.h.b16 %v151
    %v534 = vunpack.c.l.b16 %v152
    %v535 = vunpack.c.h.b16 %v152
    %v536 = vunpack.c.l.b16 %v153
    %v537 = vunpack.c.h.b16 %v153
    %v538 = vunpack.c.l.b16 %v154
    %v539 = vunpack.c.h.b16 %v154
    %v540 = vunpack.c.l.b16 %v155
    %v541 = vunpack.c.h.b16 %v155
    %v542 = vunpack.c.l.b16 %v156
    %v543 = vunpack.c.h.b16 %v156
    %v544 = vunpack.c.l.b16 %v157
    %v545 = vunpack.c.h.b16 %v157
    %v546 = vunpack.c.l.b16 %v158
    %v547 = vunpack.c.h.b16 %v158
    %v548 = vunpack.c.l.b16 %v159
    %v549 = vunpack.c.h.b16 %v159
    %v550 = vunpack.c.l.b16 %v160
    %v551 = vunpack.c.h.b16 %v160
    %v552 = vunpack.c.l.b16 %v161
    %v553 = vunpack.c.h.b16 %v161
    %v554 = vunpack.c.l.b16 %v162
    %v555 = vunpack.c.h.b16 %v162
    %v556 = vunpack.c.l.b16 %v163
    %v557 = vunpack.c.h.b16 %v163
    %v558 = vunpack.c.l.b16 %v164
    %v559 = vunpack.c.h.b16 %v164
    %v560 = vunpack.c.l.b16 %v165
    %v561 = vunpack.c.h.b16 %v165
    %v562 = vunpack.c.l.b16 %v166
    %v563 = vunpack.c.h.b16 %v166
    %v564 = vunpack.c.l.b16 %v167
    %v565 = vunpack.c.h.b16 %v167
    %v566 = vunpack.c.l.b16 %v168
    %v567 = vunpack.c.h.b16 %v168
    %v568 = vunpack.c.l.b16 %v169
    %v569 = vunpack.c.h.b16 %v169
    %v570 = vunpack.c.l.b16 %v170
    %v571 = vunpack.c.h.b16 %v170
    %v572 = vunpack.c.l.b16 %v171
    %v573 = vunpack.c.h.b16 %v171
    %v574 = vunpack.c.l.b16 %v172
    %v575 = vunpack.c.h.b16 %v172
    %v576 = vunpack.c.l.b16 %v173
    %v577 = vunpack.c.h.b16 %v173
    %v578 = vunpack.c.l.b16 %v174
    %v579 = vunpack.c.h.b16 %v174
    %v580 = vunpack.c.l.b16 %v175
    %v581 = vunpack.c.h.b16 %v175
    %v582 = vunpack.c.l.b16 %v176
    %v583 = vunpack.c.h.b16 %v176
    %v584 = vunpack.c.l.b16 %v177
    %v585 = vunpack.c.h.b16 %v177
    %v586 = vunpack.c.l.b16 %v178
    %v587 = vunpack.c.h.b16 %v178
    %v588 = vunpack.c.l.b16 %v179
    %v589 = vunpack.c.h.b16 %v179
    %v590 = vunpack.c.l.b16 %v180
    %v591 = vunpack.c.h.b16 %v180
    %v592 = vunpack.c.l.b16 %v181
    %v593 = vunpack.c.h.b16 %v181
    %v594 = vunpack.c.l.b16 %v182
    %v595 = vunpack.c.h.b16 %v182
    %v596 = vunpack.c.l.b16 %v183
    %v597 = vunpack.c.h.b16 %v183
    %v598 = vunpack.c.l.b16 %v184
    %v599 = vunpack.c.h.b16 %v184
    %v600 = vunpack.c.l.b16 %v185
    %v601 = vunpack.c.h.b16 %v185
    %v602 = vunpack.c.l.b16 %v186
    %v603 = vunpack.c.h.b16 %v186
    %v604 = vunpack.c.l.b16 %v187
    %v605 = vunpack.c.h.b16 %v187
    %v606 = vunpack.c.l.b16 %v188
    %v607 = vunpack.c.h.b16 %v188
    %v608 = vunpack.c.l.b16 %v189
    %v609 = vunpack.c.h.b16 %v189
    %v610 = vunpack.c.l.b16 %v190
    %v611 = vunpack.c.h.b16 %v190
    %v612 = vunpack.c.l.b16 %v191
    %v613 = vunpack.c.h.b16 %v191
    %v614 = vunpack.c.l.b16 %v192
    %v615 = vunpack.c.h.b16 %v192
    %v616 = vunpack.c.l.b16 %v193
    %v617 = vunpack.c.h.b16 %v193
    %v618 = vunpack.c.l.b16 %v194
    %v619 = vunpack.c.h.b16 %v194
    %v620 = vunpack.c.l.b16 %v195
    %v621 = vunpack.c.h.b16 %v195
    %v622 = vunpack.c.l.b16 %v196
    %v623 = vunpack.c.h.b16 %v196
    %v624 = vunpack.c.l.b16 %v197
    %v625 = vunpack.c.h.b16 %v197
    %v626 = vunpack.c.l.b16 %v198
    %v627 = vunpack.c.h.b16 %v198
    %v628 = vunpack.c.l.b16 %v199
    %v629 = vunpack.c.h.b16 %v199
    %v630 = vunpack.c.l.b16 %v200
    %v631 = vunpack.c.h.b16 %v200
    %v632 = vunpack.c.l.b16 %v201
    %v633 = vunpack.c.h.b16 %v201
    %v634 = vunpack.c.l.b16 %v202
    %v635 = vunpack.c.h.b16 %v202
    %v636 = vpack.c.b16 %v388, %v380
    %v637 = vpack.c.b16 %v389, %v381
    %v638 = vpack.c.b16 %v390, %v382
    %v639 = vpack.c.b16 %v391, %v383
    %v640 = vpack.c.b16 %v392, %v384
    %v641 = vpack.c.b16 %v393, %v385
    %v642 = vpack.c.b16 %v394, %v386
    %v643 = vpack.c.b16 %v395, %v387
    %v644 = vpack.c.b16 %v404, %v396
    %v645 = vpack.c.b16 %v405, %v397
    %v646 = vpack.c.b16 %v406, %v398
    %v647 = vpack.c.b16 %v407, %v399
    %v648 = vpack.c.b16 %v408, %v400
    %v649 = vpack.c.b16 %v409, %v401
    %v650 = vpack.c.b16 %v410, %v402
    %v651 = vpack.c.b16 %v411, %v403
    %v652 = vpack.c.b16 %v420, %v412
    %v653 = vpack.c.b16 %v421, %v413
    %v654 = vpack.c.b16 %v422, %v414
    %v655 = vpack.c.b16 %v423, %v415
    %v656 = vpack.c.b16 %v424, %v416
    %v657 = vpack.c.b16 %v425, %v417
    %v658 = vpack.c.b16 %v426, %v418
    %v659 = vpack.c.b16 %v427, %v419
    %v660 = vpack.c.b16 %v436, %v428
    %v661 = vpack.c.b16 %v437, %v429
    %v662 = vpack.c.b16 %v438, %v430
    %v663 = vpack.c.b16 %v439, %v431
    %v664 = vpack.c.b16 %v440, %v432
    %v665 = vpack.c.b16 %v441, %v433
    %v666 = vpack.c.b16 %v442, %v434
    %v667 = vpack.c.b16 %v443, %v435
    %v668 = vpack.c.b16 %v452, %v444
    %v669 = vpack.c.b16 %v453, %v445
    %v670 = vpack.c.b16 %v454, %v446
    %v671 = vpack.c.b16 %v455, %v447
    %v672 = vpack.c.b16 %v456, %v448
    %v673 = vpack.c.b16 %v457, %v449
    %v674 = vpack.c.b16 %v458, %v450
    %v675 = vpack.c.b16 %v459, %v451
    %v676 = vpack.c.b16 %v468, %v460
    %v677 = vpack.c.b16 %v469, %v461
    %v678 = vpack.c.b16 %v470, %v462
    %v679 = vpack.c.b16 %v471, %v463
    %v680 = vpack.c.b16 %v472, %v464
    %v681 = vpack.c.b16 %v473, %v465
    %v682 = vpack.c.b16 %v474, %v466
    %v683 = vpack.c.b16 %v475, %v467
    %v684 = vpack.c.b16 %v484, %v476
    %v685 = vpack.c.b16 %v485, %v477
    %v686 = vpack.c.b16 %v486, %v478
    %v687 = vpack.c.b16 %v487, %v479
    %v688 = vpack.c.b16 %v488, %v480
    %v689 = vpack.c.b16 %v489, %v481
    %v690 = vpack.c.b16 %v490, %v482
    %v691 = vpack.c.b16 %v491, %v483
    %v692 = vpack.c.b16 %v500, %v492
    %v693 = vpack.c.b16 %v501, %v493
    %v694 = vpack.c.b16 %v502, %v494
    %v695 = vpack.c.b16 %v503, %v495
    %v696 = vpack.c.b16 %v504, %v496
    %v697 = vpack.c.b16 %v505, %v497
    %v698 = vpack.c.b16 %v506, %v498
    %v699 = vpack.c.b16 %v507, %v499
    %v700 = vpack.c.b16 %v516, %v508
    %v701 = vpack.c.b16 %v517, %v509
    %v702 = vpack.c.b16 %v518, %v510
    %v703 = vpack.c.b16 %v519, %v511
    %v704 = vpack.c.b16 %v520, %v512
    %v705 = vpack.c.b16 %v521, %v513
    %v706 = vpack.c.b16 %v522, %v514
    %v707 = vpack.c.b16 %v523, %v515
    %v708 = vpack.c.b16 %v532, %v524
    %v709 = vpack.c.b16 %v533, %v525
    %v710 = vpack.c.b16 %v534, %v526
    %v711 = vpack.c.b16 %v535, %v527
    %v712 = vpack.c.b16 %v536, %v528
    %v713 = vpack.c.b16 %v537, %v529
    %v714 = vpack.c.b16 %v538, %v530
    %v715 = vpack.c.b16 %v539, %v531
    %v716 = vpack.c.b16 %v548, %v540
    %v717 = vpack.c.b16 %v549, %v541
    %v718 = vpack.c.b16 %v550, %v542
    %v719 = vpack.c.b16 %v551, %v543
    %v720 = vpack.c.b16 %v552, %v544
    %v721 = vpack.c.b16 %v553, %v545
    %v722 = vpack.c.b16 %v554, %v546
    %v723 = vpack.c.b16 %v555, %v547
    %v724 = vpack.c.b16 %v564, %v556
    %v725 = vpack.c.b16 %v565, %v557
    %v726 = vpack.c.b16 %v566, %v558
    %v727 = vpack.c.b16 %v567, %v559
    %v728 = vpack.c.b16 %v568, %v560
    %v729 = vpack.c.b16 %v569, %v561
    %v730 = vpack.c.b16 %v570, %v562
    %v731 = vpack.c.b16 %v571, %v563
    %v732 = vpack.c.b16 %v580, %v572
    %v733 = vpack.c.b16 %v581, %v573
    %v734 = vpack.c.b16 %v582, %v574
    %v735 = vpack.c.b16 %v583, %v575
    %v736 = vpack.c.b16 %v584, %v576
    %v737 = vpack.c.b16 %v585, %v577
    %v738 = vpack.c.b16 %v586, %v578
    %v739 = vpack.c.b16 %v587, %v579
    %v740 = vpack.c.b16 %v596, %v588
    %v741 = vpack.c.b16 %v597, %v589
    %v742 = vpack.c.b16 %v598, %v590
    %v743 = vpack.c.b16 %v599, %v591
    %v744 = vpack.c.b16 %v600, %v592
    %v745 = vpack.c.b16 %v601, %v593
    %v746 = vpack.c.b16 %v602, %v594
    %v747 = vpack.c.b16 %v603, %v595
    %v748 = vpack.c.b16 %v612, %v604
    %v749 = vpack.c.b16 %v613, %v605
    %v750 = vpack.c.b16 %v614, %v606
    %v751 = vpack.c.b16 %v615, %v607
    %v752 = vpack.c.b16 %v616, %v608
    %v753 = vpack.c.b16 %v617, %v609
    %v754 = vpack.c.b16 %v618, %v610
    %v755 = vpack.c.b16 %v619, %v611
    %v756 = vpack.c.b16 %v628, %v620
    %v757 = vpack.c.b16 %v629, %v621
    %v758 = vpack.c.b16 %v630, %v622
    %v759 = vpack.c.b16 %v631, %v623
    %v760 = vpack.c.b16 %v632, %v624
    %v761 = vpack.c.b16 %v633, %v625
    %v762 = vpack.c.b16 %v634, %v626
    %v763 = vpack.c.b16 %v635, %v627
    %892 = vmatprep.subr.bf16.mxu0 %v637
    %893 = vmatpush1.bf16.msra.mxu0 %v636
    %894 = vmatprep.subr.bf16.mxu0 %v645
    %895 = vmatpush1.bf16.msra.mxu0 %v644
    %896 = vmatprep.subr.bf16.mxu0 %v653
    %897 = vmatpush1.bf16.msra.mxu0 %v652
    %898 = vmatprep.subr.bf16.mxu0 %v661
    %899 = vmatpush1.bf16.msra.mxu0 %v660
    %900 = vmatprep.subr.bf16.mxu0 %v669
    %901 = vmatpush1.bf16.msra.mxu0 %v668
    %902 = vmatprep.subr.bf16.mxu0 %v677
    %903 = vmatpush1.bf16.msra.mxu0 %v676
    %904 = vmatprep.subr.bf16.mxu0 %v685
    %905 = vmatpush1.bf16.msra.mxu0 %v684
    %906 = vmatprep.subr.bf16.mxu0 %v693
    %907 = vmatpush1.bf16.msra.mxu0 %v692
    %908 = vmatprep.subr.bf16.mxu0 %v701
    %909 = vmatpush1.bf16.msra.mxu0 %v700
    %910 = vmatprep.subr.bf16.mxu0 %v709
    %911 = vmatpush1.bf16.msra.mxu0 %v708
    %912 = vmatprep.subr.bf16.mxu0 %v717
    %913 = vmatpush1.bf16.msra.mxu0 %v716
    %914 = vmatprep.subr.bf16.mxu0 %v725
    %915 = vmatpush1.bf16.msra.mxu0 %v724
    %916 = vmatprep.subr.bf16.mxu0 %v733
    %917 = vmatpush1.bf16.msra.mxu0 %v732
    %918 = vmatprep.subr.bf16.mxu0 %v741
    %919 = vmatpush1.bf16.msra.mxu0 %v740
    %920 = vmatprep.subr.bf16.mxu0 %v749
    %921 = vmatpush1.bf16.msra.mxu0 %v748
    %922 = vmatprep.subr.bf16.mxu0 %v757
    %923 = vmatpush1.bf16.msra.mxu0 %v756
    %924 = vmatprep.mubr.bf16.mxu0 %v249
    %925 = vmatmul.mubr.bf16.gmra.mrb[0].mxu0 %v248
    %v926 = vpop.f32.mrb[0].mxu0
    %v927 = vadd.f32 %v208, %v926
    %v928 = vpop.f32.mrb[0].mxu0
    %v929 = vadd.f32 %v212, %v928
    %v930 = vpop.f32.mrb[0].mxu0
    %v931 = vpop.f32.mrb[0].mxu0
    %932 = vdwg.mxu0
    %933 = vmatprep.subr.bf16.mxu0 %v639
    %934 = vmatpush1.bf16.msra.mxu0 %v638
    %935 = vmatprep.subr.bf16.mxu0 %v647
    %936 = vmatpush1.bf16.msra.mxu0 %v646
    %937 = vmatprep.subr.bf16.mxu0 %v655
    %938 = vmatpush1.bf16.msra.mxu0 %v654
    %939 = vmatprep.subr.bf16.mxu0 %v663
    %940 = vmatpush1.bf16.msra.mxu0 %v662
    %941 = vmatprep.subr.bf16.mxu0 %v671
    %942 = vmatpush1.bf16.msra.mxu0 %v670
    %943 = vmatprep.subr.bf16.mxu0 %v679
    %944 = vmatpush1.bf16.msra.mxu0 %v678
    %945 = vmatprep.subr.bf16.mxu0 %v687
    %946 = vmatpush1.bf16.msra.mxu0 %v686
    %947 = vmatprep.subr.bf16.mxu0 %v695
    %948 = vmatpush1.bf16.msra.mxu0 %v694
    %949 = vmatprep.subr.bf16.mxu0 %v703
    %950 = vmatpush1.bf16.msra.mxu0 %v702
    %951 = vmatprep.subr.bf16.mxu0 %v711
    %952 = vmatpush1.bf16.msra.mxu0 %v710
    %953 = vmatprep.subr.bf16.mxu0 %v719
    %954 = vmatpush1.bf16.msra.mxu0 %v718
    %955 = vmatprep.subr.bf16.mxu0 %v727
    %956 = vmatpush1.bf16.msra.mxu0 %v726
    %957 = vmatprep.subr.bf16.mxu0 %v735
    %958 = vmatpush1.bf16.msra.mxu0 %v734
    %959 = vmatprep.subr.bf16.mxu0 %v743
    %960 = vmatpush1.bf16.msra.mxu0 %v742
    %961 = vmatprep.subr.bf16.mxu0 %v751
    %962 = vmatpush1.bf16.msra.mxu0 %v750
    %963 = vmatprep.subr.bf16.mxu0 %v759
    %964 = vmatpush1.bf16.msra.mxu0 %v758
    %965 = vmatprep.mubr.bf16.mxu0 %v249
    %966 = vmatmul.mubr.bf16.gmra.mrb[0].mxu0 %v248
    %v967 = vpop.f32.mrb[0].mxu0
    %v968 = vadd.f32 %v216, %v967
    %v969 = vpop.f32.mrb[0].mxu0
    %v970 = vadd.f32 %v220, %v969
    %v971 = vpop.f32.mrb[0].mxu0
    %v972 = vpop.f32.mrb[0].mxu0
    %973 = vdwg.mxu0
    %974 = vmatprep.subr.bf16.mxu0 %v641
    %975 = vmatpush1.bf16.msra.mxu0 %v640
    %976 = vmatprep.subr.bf16.mxu0 %v649
    %977 = vmatpush1.bf16.msra.mxu0 %v648
    %978 = vmatprep.subr.bf16.mxu0 %v657
    %979 = vmatpush1.bf16.msra.mxu0 %v656
    %980 = vmatprep.subr.bf16.mxu0 %v665
    %981 = vmatpush1.bf16.msra.mxu0 %v664
    %982 = vmatprep.subr.bf16.mxu0 %v673
    %983 = vmatpush1.bf16.msra.mxu0 %v672
    %984 = vmatprep.subr.bf16.mxu0 %v681
    %985 = vmatpush1.bf16.msra.mxu0 %v680
    %986 = vmatprep.subr.bf16.mxu0 %v689
    %987 = vmatpush1.bf16.msra.mxu0 %v688
    %988 = vmatprep.subr.bf16.mxu0 %v697
    %989 = vmatpush1.bf16.msra.mxu0 %v696
    %990 = vmatprep.subr.bf16.mxu0 %v705
    %991 = vmatpush1.bf16.msra.mxu0 %v704
    %992 = vmatprep.subr.bf16.mxu0 %v713
    %993 = vmatpush1.bf16.msra.mxu0 %v712
    %994 = vmatprep.subr.bf16.mxu0 %v721
    %995 = vmatpush1.bf16.msra.mxu0 %v720
    %996 = vmatprep.subr.bf16.mxu0 %v729
    %997 = vmatpush1.bf16.msra.mxu0 %v728
    %998 = vmatprep.subr.bf16.mxu0 %v737
    %999 = vmatpush1.bf16.msra.mxu0 %v736
    %1000 = vmatprep.subr.bf16.mxu0 %v745
    %1001 = vmatpush1.bf16.msra.mxu0 %v744
    %1002 = vmatprep.subr.bf16.mxu0 %v753
    %1003 = vmatpush1.bf16.msra.mxu0 %v752
    %1004 = vmatprep.subr.bf16.mxu0 %v761
    %1005 = vmatpush1.bf16.msra.mxu0 %v760
    %1006 = vmatprep.mubr.bf16.mxu0 %v249
    %1007 = vmatmul.mubr.bf16.gmra.mrb[0].mxu0 %v248
    %v1008 = vpop.f32.mrb[0].mxu0
    %v1009 = vadd.f32 %v224, %v1008
    %v1010 = vpop.f32.mrb[0].mxu0
    %v1011 = vadd.f32 %v228, %v1010
    %v1012 = vpop.f32.mrb[0].mxu0
    %v1013 = vpop.f32.mrb[0].mxu0
    %1014 = vdwg.mxu0
    %1015 = vmatprep.subr.bf16.mxu0 %v643
    %1016 = vmatpush1.bf16.msra.mxu0 %v642
    %1017 = vmatprep.subr.bf16.mxu0 %v651
    %1018 = vmatpush1.bf16.msra.mxu0 %v650
    %1019 = vmatprep.subr.bf16.mxu0 %v659
    %1020 = vmatpush1.bf16.msra.mxu0 %v658
    %1021 = vmatprep.subr.bf16.mxu0 %v667
    %1022 = vmatpush1.bf16.msra.mxu0 %v666
    %1023 = vmatprep.subr.bf16.mxu0 %v675
    %1024 = vmatpush1.bf16.msra.mxu0 %v674
    %1025 = vmatprep.subr.bf16.mxu0 %v683
    %1026 = vmatpush1.bf16.msra.mxu0 %v682
    %1027 = vmatprep.subr.bf16.mxu0 %v691
    %1028 = vmatpush1.bf16.msra.mxu0 %v690
    %1029 = vmatprep.subr.bf16.mxu0 %v699
    %1030 = vmatpush1.bf16.msra.mxu0 %v698
    %1031 = vmatprep.subr.bf16.mxu0 %v707
    %1032 = vmatpush1.bf16.msra.mxu0 %v706
    %1033 = vmatprep.subr.bf16.mxu0 %v715
    %1034 = vmatpush1.bf16.msra.mxu0 %v714
    %1035 = vmatprep.subr.bf16.mxu0 %v723
    %1036 = vmatpush1.bf16.msra.mxu0 %v722
    %1037 = vmatprep.subr.bf16.mxu0 %v731
    %1038 = vmatpush1.bf16.msra.mxu0 %v730
    %1039 = vmatprep.subr.bf16.mxu0 %v739
    %1040 = vmatpush1.bf16.msra.mxu0 %v738
    %1041 = vmatprep.subr.bf16.mxu0 %v747
    %1042 = vmatpush1.bf16.msra.mxu0 %v746
    %1043 = vmatprep.subr.bf16.mxu0 %v755
    %1044 = vmatpush1.bf16.msra.mxu0 %v754
    %1045 = vmatprep.subr.bf16.mxu0 %v763
    %1046 = vmatpush1.bf16.msra.mxu0 %v762
    %1047 = vmatprep.mubr.bf16.mxu0 %v249
    %1048 = vmatmul.mubr.bf16.gmra.mrb[0].mxu0 %v248
    %v1049 = vpop.f32.mrb[0].mxu0
    %v1050 = vadd.f32 %v232, %v1049
    %v1051 = vpop.f32.mrb[0].mxu0
    %v1052 = vadd.f32 %v236, %v1051
    %v1053 = vpop.f32.mrb[0].mxu0
    %v1054 = vpop.f32.mrb[0].mxu0
    %1055 = vdwg.mxu0
    %v1056 = vmax.f32 %v927, 0.0
    %v1057 = vmax.f32 %v929, 0.0
    %v1058 = vmax.f32 %v968, 0.0
    %v1059 = vmax.f32 %v970, 0.0
    %v1060 = vmax.f32 %v1009, 0.0
    %v1061 = vmax.f32 %v1011, 0.0
    %v1062 = vmax.f32 %v1050, 0.0
    %v1063 = vmax.f32 %v1052, 0.0
    %v1064 = vpack.c.bf16 %v1056, %v1056
    %v1065 = vpack.c.bf16 %v1057, %v1057
    %v1066 = vpack.c.bf16 %v1058, %v1058
    %v1067 = vpack.c.bf16 %v1059, %v1059
    %v1068 = vpack.c.bf16 %v1060, %v1060
    %v1069 = vpack.c.bf16 %v1061, %v1061
    %v1070 = vpack.c.bf16 %v1062, %v1062
    %v1071 = vpack.c.bf16 %v1063, %v1063
    %v1072 = vld [vmem:[#allocation4] sm:$0xff]
    %v1073 = vld [vmem:[#allocation4 + $0x8] sm:$0xff]
    %v1074 = vld [vmem:[#allocation4 + $0x10] sm:$0xff]
    %v1075 = vld [vmem:[#allocation4 + $0x18] sm:$0xff]
    %v1076 = vld [vmem:[#allocation4 + $0x20] sm:$0xff]
    %v1077 = vld [vmem:[#allocation4 + $0x28] sm:$0xff]
    %v1078 = vld [vmem:[#allocation4 + $0x30] sm:$0xff]
    %v1079 = vld [vmem:[#allocation4 + $0x38] sm:$0xff]
    %v1080 = vld [vmem:[#allocation4 + $0x40] sm:$0xff]
    %v1081 = vld [vmem:[#allocation4 + $0x48] sm:$0xff]
    %v1082 = vld [vmem:[#allocation4 + $0x50] sm:$0xff]
    %v1083 = vld [vmem:[#allocation4 + $0x58] sm:$0xff]
    %v1084 = vld [vmem:[#allocation4 + $0x60] sm:$0xff]
    %v1085 = vld [vmem:[#allocation4 + $0x68] sm:$0xff]
    %v1086 = vld [vmem:[#allocation4 + $0x70] sm:$0xff]
    %v1087 = vld [vmem:[#allocation4 + $0x78] sm:$0xff]
    %v1088 = vld [vmem:[#allocation4 + $0x80] sm:$0xff]
    %v1089 = vld [vmem:[#allocation4 + $0x88] sm:$0xff]
    %v1090 = vld [vmem:[#allocation4 + $0x90] sm:$0xff]
    %v1091 = vld [vmem:[#allocation4 + $0x98] sm:$0xff]
    %v1092 = vld [vmem:[#allocation4 + $0xa0] sm:$0xff]
    %v1093 = vld [vmem:[#allocation4 + $0xa8] sm:$0xff]
    %v1094 = vld [vmem:[#allocation4 + $0xb0] sm:$0xff]
    %v1095 = vld [vmem:[#allocation4 + $0xb8] sm:$0xff]
    %v1096 = vld [vmem:[#allocation4 + $0xc0] sm:$0xff]
    %v1097 = vld [vmem:[#allocation4 + $0xc8] sm:$0xff]
    %v1098 = vld [vmem:[#allocation4 + $0xd0] sm:$0xff]
    %v1099 = vld [vmem:[#allocation4 + $0xd8] sm:$0xff]
    %v1100 = vld [vmem:[#allocation4 + $0xe0] sm:$0xff]
    %v1101 = vld [vmem:[#allocation4 + $0xe8] sm:$0xff]
    %v1102 = vld [vmem:[#allocation4 + $0xf0] sm:$0xff]
    %v1103 = vld [vmem:[#allocation4 + $0xf8] sm:$0xff]
    %v1104 = vld [vmem:[#allocation4 + $0x100] sm:$0xff]
    %v1105 = vld [vmem:[#allocation4 + $0x108] sm:$0xff]
    %v1106 = vld [vmem:[#allocation4 + $0x110] sm:$0xff]
    %v1107 = vld [vmem:[#allocation4 + $0x118] sm:$0xff]
    %v1108 = vld [vmem:[#allocation4 + $0x120] sm:$0xff]
    %v1109 = vld [vmem:[#allocation4 + $0x128] sm:$0xff]
    %v1110 = vld [vmem:[#allocation4 + $0x130] sm:$0xff]
    %v1111 = vld [vmem:[#allocation4 + $0x138] sm:$0xff]
    %v1112 = vld [vmem:[#allocation4 + $0x140] sm:$0xff]
    %v1113 = vld [vmem:[#allocation4 + $0x148] sm:$0xff]
    %v1114 = vld [vmem:[#allocation4 + $0x150] sm:$0xff]
    %v1115 = vld [vmem:[#allocation4 + $0x158] sm:$0xff]
    %v1116 = vld [vmem:[#allocation4 + $0x160] sm:$0xff]
    %v1117 = vld [vmem:[#allocation4 + $0x168] sm:$0xff]
    %v1118 = vld [vmem:[#allocation4 + $0x170] sm:$0xff]
    %v1119 = vld [vmem:[#allocation4 + $0x178] sm:$0xff]
    %v1120 = vld [vmem:[#allocation4 + $0x180] sm:$0xff]
    %v1121 = vld [vmem:[#allocation4 + $0x188] sm:$0xff]
    %v1122 = vld [vmem:[#allocation4 + $0x190] sm:$0xff]
    %v1123 = vld [vmem:[#allocation4 + $0x198] sm:$0xff]
    %v1124 = vld [vmem:[#allocation4 + $0x1a0] sm:$0xff]
    %v1125 = vld [vmem:[#allocation4 + $0x1a8] sm:$0xff]
    %v1126 = vld [vmem:[#allocation4 + $0x1b0] sm:$0xff]
    %v1127 = vld [vmem:[#allocation4 + $0x1b8] sm:$0xff]
    %v1128 = vld [vmem:[#allocation4 + $0x1c0] sm:$0xff]
    %v1129 = vld [vmem:[#allocation4 + $0x1c8] sm:$0xff]
    %v1130 = vld [vmem:[#allocation4 + $0x1d0] sm:$0xff]
    %v1131 = vld [vmem:[#allocation4 + $0x1d8] sm:$0xff]
    %v1132 = vld [vmem:[#allocation4 + $0x1e0] sm:$0xff]
    %v1133 = vld [vmem:[#allocation4 + $0x1e8] sm:$0xff]
    %v1134 = vld [vmem:[#allocation4 + $0x1f0] sm:$0xff]
    %v1135 = vld [vmem:[#allocation4 + $0x1f8] sm:$0xff]
    %v1136 = vld [vmem:[#allocation4 + $0x200] sm:$0xff]
    %v1137 = vld [vmem:[#allocation4 + $0x208] sm:$0xff]
    %v1138 = vld [vmem:[#allocation4 + $0x210] sm:$0xff]
    %v1139 = vld [vmem:[#allocation4 + $0x218] sm:$0xff]
    %v1140 = vld [vmem:[#allocation4 + $0x220] sm:$0xff]
    %v1141 = vld [vmem:[#allocation4 + $0x228] sm:$0xff]
    %v1142 = vld [vmem:[#allocation4 + $0x230] sm:$0xff]
    %v1143 = vld [vmem:[#allocation4 + $0x238] sm:$0xff]
    %v1144 = vld [vmem:[#allocation4 + $0x240] sm:$0xff]
    %v1145 = vld [vmem:[#allocation4 + $0x248] sm:$0xff]
    %v1146 = vld [vmem:[#allocation4 + $0x250] sm:$0xff]
    %v1147 = vld [vmem:[#allocation4 + $0x258] sm:$0xff]
    %v1148 = vld [vmem:[#allocation4 + $0x260] sm:$0xff]
    %v1149 = vld [vmem:[#allocation4 + $0x268] sm:$0xff]
    %v1150 = vld [vmem:[#allocation4 + $0x270] sm:$0xff]
    %v1151 = vld [vmem:[#allocation4 + $0x278] sm:$0xff]
    %v1152 = vld [vmem:[#allocation4 + $0x280] sm:$0xff]
    %v1153 = vld [vmem:[#allocation4 + $0x288] sm:$0xff]
    %v1154 = vld [vmem:[#allocation4 + $0x290] sm:$0xff]
    %v1155 = vld [vmem:[#allocation4 + $0x298] sm:$0xff]
    %v1156 = vld [vmem:[#allocation4 + $0x2a0] sm:$0xff]
    %v1157 = vld [vmem:[#allocation4 + $0x2a8] sm:$0xff]
    %v1158 = vld [vmem:[#allocation4 + $0x2b0] sm:$0xff]
    %v1159 = vld [vmem:[#allocation4 + $0x2b8] sm:$0xff]
    %v1160 = vld [vmem:[#allocation4 + $0x2c0] sm:$0xff]
    %v1161 = vld [vmem:[#allocation4 + $0x2c8] sm:$0xff]
    %v1162 = vld [vmem:[#allocation4 + $0x2d0] sm:$0xff]
    %v1163 = vld [vmem:[#allocation4 + $0x2d8] sm:$0xff]
    %v1164 = vld [vmem:[#allocation4 + $0x2e0] sm:$0xff]
    %v1165 = vld [vmem:[#allocation4 + $0x2e8] sm:$0xff]
    %v1166 = vld [vmem:[#allocation4 + $0x2f0] sm:$0xff]
    %v1167 = vld [vmem:[#allocation4 + $0x2f8] sm:$0xff]
    %v1168 = vld [vmem:[#allocation4 + $0x300] sm:$0xff]
    %v1169 = vld [vmem:[#allocation4 + $0x308] sm:$0xff]
    %v1170 = vld [vmem:[#allocation4 + $0x310] sm:$0xff]
    %v1171 = vld [vmem:[#allocation4 + $0x318] sm:$0xff]
    %v1172 = vld [vmem:[#allocation4 + $0x320] sm:$0xff]
    %v1173 = vld [vmem:[#allocation4 + $0x328] sm:$0xff]
    %v1174 = vld [vmem:[#allocation4 + $0x330] sm:$0xff]
    %v1175 = vld [vmem:[#allocation4 + $0x338] sm:$0xff]
    %v1176 = vld [vmem:[#allocation4 + $0x340] sm:$0xff]
    %v1177 = vld [vmem:[#allocation4 + $0x348] sm:$0xff]
    %v1178 = vld [vmem:[#allocation4 + $0x350] sm:$0xff]
    %v1179 = vld [vmem:[#allocation4 + $0x358] sm:$0xff]
    %v1180 = vld [vmem:[#allocation4 + $0x360] sm:$0xff]
    %v1181 = vld [vmem:[#allocation4 + $0x368] sm:$0xff]
    %v1182 = vld [vmem:[#allocation4 + $0x370] sm:$0xff]
    %v1183 = vld [vmem:[#allocation4 + $0x378] sm:$0xff]
    %v1184 = vld [vmem:[#allocation4 + $0x380] sm:$0xff]
    %v1185 = vld [vmem:[#allocation4 + $0x388] sm:$0xff]
    %v1186 = vld [vmem:[#allocation4 + $0x390] sm:$0xff]
    %v1187 = vld [vmem:[#allocation4 + $0x398] sm:$0xff]
    %v1188 = vld [vmem:[#allocation4 + $0x3a0] sm:$0xff]
    %v1189 = vld [vmem:[#allocation4 + $0x3a8] sm:$0xff]
    %v1190 = vld [vmem:[#allocation4 + $0x3b0] sm:$0xff]
    %v1191 = vld [vmem:[#allocation4 + $0x3b8] sm:$0xff]
    %v1192 = vld [vmem:[#allocation4 + $0x3c0] sm:$0xff]
    %v1193 = vld [vmem:[#allocation4 + $0x3c8] sm:$0xff]
    %v1194 = vld [vmem:[#allocation4 + $0x3d0] sm:$0xff]
    %v1195 = vld [vmem:[#allocation4 + $0x3d8] sm:$0xff]
    %v1196 = vld [vmem:[#allocation4 + $0x3e0] sm:$0xff]
    %v1197 = vld [vmem:[#allocation4 + $0x3e8] sm:$0xff]
    %v1198 = vld [vmem:[#allocation4 + $0x3f0] sm:$0xff]
    %v1199 = vld [vmem:[#allocation4 + $0x3f8] sm:$0xff]
    %v1200 = vld [vmem:[#allocation4 + $0x400] sm:$0xff]
    %v1201 = vld [vmem:[#allocation4 + $0x408] sm:$0xff]
    %v1202 = vld [vmem:[#allocation4 + $0x410] sm:$0xff]
    %v1203 = vld [vmem:[#allocation4 + $0x418] sm:$0xff]
    %v1204 = vld [vmem:[#allocation4 + $0x420] sm:$0xff]
    %v1205 = vld [vmem:[#allocation4 + $0x428] sm:$0xff]
    %v1206 = vld [vmem:[#allocation4 + $0x430] sm:$0xff]
    %v1207 = vld [vmem:[#allocation4 + $0x438] sm:$0xff]
    %v1208 = vld [vmem:[#allocation4 + $0x440] sm:$0xff]
    %v1209 = vld [vmem:[#allocation4 + $0x448] sm:$0xff]
    %v1210 = vld [vmem:[#allocation4 + $0x450] sm:$0xff]
    %v1211 = vld [vmem:[#allocation4 + $0x458] sm:$0xff]
    %v1212 = vld [vmem:[#allocation4 + $0x460] sm:$0xff]
    %v1213 = vld [vmem:[#allocation4 + $0x468] sm:$0xff]
    %v1214 = vld [vmem:[#allocation4 + $0x470] sm:$0xff]
    %v1215 = vld [vmem:[#allocation4 + $0x478] sm:$0xff]
    %v1216 = vld [vmem:[#allocation4 + $0x480] sm:$0xff]
    %v1217 = vld [vmem:[#allocation4 + $0x488] sm:$0xff]
    %v1218 = vld [vmem:[#allocation4 + $0x490] sm:$0xff]
    %v1219 = vld [vmem:[#allocation4 + $0x498] sm:$0xff]
    %v1220 = vld [vmem:[#allocation4 + $0x4a0] sm:$0xff]
    %v1221 = vld [vmem:[#allocation4 + $0x4a8] sm:$0xff]
    %v1222 = vld [vmem:[#allocation4 + $0x4b0] sm:$0xff]
    %v1223 = vld [vmem:[#allocation4 + $0x4b8] sm:$0xff]
    %v1224 = vld [vmem:[#allocation4 + $0x4c0] sm:$0xff]
    %v1225 = vld [vmem:[#allocation4 + $0x4c8] sm:$0xff]
    %v1226 = vld [vmem:[#allocation4 + $0x4d0] sm:$0xff]
    %v1227 = vld [vmem:[#allocation4 + $0x4d8] sm:$0xff]
    %v1228 = vld [vmem:[#allocation4 + $0x4e0] sm:$0xff]
    %v1229 = vld [vmem:[#allocation4 + $0x4e8] sm:$0xff]
    %v1230 = vld [vmem:[#allocation4 + $0x4f0] sm:$0xff]
    %v1231 = vld [vmem:[#allocation4 + $0x4f8] sm:$0xff]
    %v1232 = vld [vmem:[#allocation4 + $0x500] sm:$0xff]
    %v1233 = vld [vmem:[#allocation4 + $0x508] sm:$0xff]
    %v1234 = vld [vmem:[#allocation4 + $0x510] sm:$0xff]
    %v1235 = vld [vmem:[#allocation4 + $0x518] sm:$0xff]
    %v1236 = vld [vmem:[#allocation4 + $0x520] sm:$0xff]
    %v1237 = vld [vmem:[#allocation4 + $0x528] sm:$0xff]
    %v1238 = vld [vmem:[#allocation4 + $0x530] sm:$0xff]
    %v1239 = vld [vmem:[#allocation4 + $0x538] sm:$0xff]
    %v1240 = vld [vmem:[#allocation4 + $0x540] sm:$0xff]
    %v1241 = vld [vmem:[#allocation4 + $0x548] sm:$0xff]
    %v1242 = vld [vmem:[#allocation4 + $0x550] sm:$0xff]
    %v1243 = vld [vmem:[#allocation4 + $0x558] sm:$0xff]
    %v1244 = vld [vmem:[#allocation4 + $0x560] sm:$0xff]
    %v1245 = vld [vmem:[#allocation4 + $0x568] sm:$0xff]
    %v1246 = vld [vmem:[#allocation4 + $0x570] sm:$0xff]
    %v1247 = vld [vmem:[#allocation4 + $0x578] sm:$0xff]
    %v1248 = vld [vmem:[#allocation4 + $0x580] sm:$0xff]
    %v1249 = vld [vmem:[#allocation4 + $0x588] sm:$0xff]
    %v1250 = vld [vmem:[#allocation4 + $0x590] sm:$0xff]
    %v1251 = vld [vmem:[#allocation4 + $0x598] sm:$0xff]
    %v1252 = vld [vmem:[#allocation4 + $0x5a0] sm:$0xff]
    %v1253 = vld [vmem:[#allocation4 + $0x5a8] sm:$0xff]
    %v1254 = vld [vmem:[#allocation4 + $0x5b0] sm:$0xff]
    %v1255 = vld [vmem:[#allocation4 + $0x5b8] sm:$0xff]
    %v1256 = vld [vmem:[#allocation4 + $0x5c0] sm:$0xff]
    %v1257 = vld [vmem:[#allocation4 + $0x5c8] sm:$0xff]
    %v1258 = vld [vmem:[#allocation4 + $0x5d0] sm:$0xff]
    %v1259 = vld [vmem:[#allocation4 + $0x5d8] sm:$0xff]
    %v1260 = vld [vmem:[#allocation4 + $0x5e0] sm:$0xff]
    %v1261 = vld [vmem:[#allocation4 + $0x5e8] sm:$0xff]
    %v1262 = vld [vmem:[#allocation4 + $0x5f0] sm:$0xff]
    %v1263 = vld [vmem:[#allocation4 + $0x5f8] sm:$0xff]
    %v1264 = vld [vmem:[#allocation4 + $0x600] sm:$0xff]
    %v1265 = vld [vmem:[#allocation4 + $0x608] sm:$0xff]
    %v1266 = vld [vmem:[#allocation4 + $0x610] sm:$0xff]
    %v1267 = vld [vmem:[#allocation4 + $0x618] sm:$0xff]
    %v1268 = vld [vmem:[#allocation4 + $0x620] sm:$0xff]
    %v1269 = vld [vmem:[#allocation4 + $0x628] sm:$0xff]
    %v1270 = vld [vmem:[#allocation4 + $0x630] sm:$0xff]
    %v1271 = vld [vmem:[#allocation4 + $0x638] sm:$0xff]
    %v1272 = vld [vmem:[#allocation4 + $0x640] sm:$0xff]
    %v1273 = vld [vmem:[#allocation4 + $0x648] sm:$0xff]
    %v1274 = vld [vmem:[#allocation4 + $0x650] sm:$0xff]
    %v1275 = vld [vmem:[#allocation4 + $0x658] sm:$0xff]
    %v1276 = vld [vmem:[#allocation4 + $0x660] sm:$0xff]
    %v1277 = vld [vmem:[#allocation4 + $0x668] sm:$0xff]
    %v1278 = vld [vmem:[#allocation4 + $0x670] sm:$0xff]
    %v1279 = vld [vmem:[#allocation4 + $0x678] sm:$0xff]
    %v1280 = vld [vmem:[#allocation4 + $0x680] sm:$0xff]
    %v1281 = vld [vmem:[#allocation4 + $0x688] sm:$0xff]
    %v1282 = vld [vmem:[#allocation4 + $0x690] sm:$0xff]
    %v1283 = vld [vmem:[#allocation4 + $0x698] sm:$0xff]
    %v1284 = vld [vmem:[#allocation4 + $0x6a0] sm:$0xff]
    %v1285 = vld [vmem:[#allocation4 + $0x6a8] sm:$0xff]
    %v1286 = vld [vmem:[#allocation4 + $0x6b0] sm:$0xff]
    %v1287 = vld [vmem:[#allocation4 + $0x6b8] sm:$0xff]
    %v1288 = vld [vmem:[#allocation4 + $0x6c0] sm:$0xff]
    %v1289 = vld [vmem:[#allocation4 + $0x6c8] sm:$0xff]
    %v1290 = vld [vmem:[#allocation4 + $0x6d0] sm:$0xff]
    %v1291 = vld [vmem:[#allocation4 + $0x6d8] sm:$0xff]
    %v1292 = vld [vmem:[#allocation4 + $0x6e0] sm:$0xff]
    %v1293 = vld [vmem:[#allocation4 + $0x6e8] sm:$0xff]
    %v1294 = vld [vmem:[#allocation4 + $0x6f0] sm:$0xff]
    %v1295 = vld [vmem:[#allocation4 + $0x6f8] sm:$0xff]
    %v1296 = vld [vmem:[#allocation4 + $0x700] sm:$0xff]
    %v1297 = vld [vmem:[#allocation4 + $0x708] sm:$0xff]
    %v1298 = vld [vmem:[#allocation4 + $0x710] sm:$0xff]
    %v1299 = vld [vmem:[#allocation4 + $0x718] sm:$0xff]
    %v1300 = vld [vmem:[#allocation4 + $0x720] sm:$0xff]
    %v1301 = vld [vmem:[#allocation4 + $0x728] sm:$0xff]
    %v1302 = vld [vmem:[#allocation4 + $0x730] sm:$0xff]
    %v1303 = vld [vmem:[#allocation4 + $0x738] sm:$0xff]
    %v1304 = vld [vmem:[#allocation4 + $0x740] sm:$0xff]
    %v1305 = vld [vmem:[#allocation4 + $0x748] sm:$0xff]
    %v1306 = vld [vmem:[#allocation4 + $0x750] sm:$0xff]
    %v1307 = vld [vmem:[#allocation4 + $0x758] sm:$0xff]
    %v1308 = vld [vmem:[#allocation4 + $0x760] sm:$0xff]
    %v1309 = vld [vmem:[#allocation4 + $0x768] sm:$0xff]
    %v1310 = vld [vmem:[#allocation4 + $0x770] sm:$0xff]
    %v1311 = vld [vmem:[#allocation4 + $0x778] sm:$0xff]
    %v1312 = vld [vmem:[#allocation4 + $0x780] sm:$0xff]
    %v1313 = vld [vmem:[#allocation4 + $0x788] sm:$0xff]
    %v1314 = vld [vmem:[#allocation4 + $0x790] sm:$0xff]
    %v1315 = vld [vmem:[#allocation4 + $0x798] sm:$0xff]
    %v1316 = vld [vmem:[#allocation4 + $0x7a0] sm:$0xff]
    %v1317 = vld [vmem:[#allocation4 + $0x7a8] sm:$0xff]
    %v1318 = vld [vmem:[#allocation4 + $0x7b0] sm:$0xff]
    %v1319 = vld [vmem:[#allocation4 + $0x7b8] sm:$0xff]
    %v1320 = vld [vmem:[#allocation4 + $0x7c0] sm:$0xff]
    %v1321 = vld [vmem:[#allocation4 + $0x7c8] sm:$0xff]
    %v1322 = vld [vmem:[#allocation4 + $0x7d0] sm:$0xff]
    %v1323 = vld [vmem:[#allocation4 + $0x7d8] sm:$0xff]
    %v1324 = vld [vmem:[#allocation4 + $0x7e0] sm:$0xff]
    %v1325 = vld [vmem:[#allocation4 + $0x7e8] sm:$0xff]
    %v1326 = vld [vmem:[#allocation4 + $0x7f0] sm:$0xff]
    %v1327 = vld [vmem:[#allocation4 + $0x7f8] sm:$0xff]
    %v1328 = vld [vmem:[%s4] sm:$0xf]
    %v1330 = vlaneseq
    %v1331 = vshrl.u32 %v1330, 7
    %v1332 = vsub.s32 0, %v1331
    %v1333 = vrot.slane %v1328, %v1332
    %v1334 = vlaneseq
    %v1335 = vshrl.u32 %v1334, 7
    %v1336 = vsub.s32 1, %v1335
    %v1337 = vrot.slane %v1328, %v1336
    %v1338 = vlaneseq
    %v1339 = vshrl.u32 %v1338, 7
    %v1340 = vsub.s32 2, %v1339
    %v1341 = vrot.slane %v1328, %v1340
    %v1342 = vlaneseq
    %v1343 = vshrl.u32 %v1342, 7
    %v1344 = vsub.s32 3, %v1343
    %v1345 = vrot.slane %v1328, %v1344
    %v1606 = vunpack.c.l.b16 %v1072
    %v1607 = vunpack.c.h.b16 %v1072
    %v1608 = vunpack.c.l.b16 %v1073
    %v1609 = vunpack.c.h.b16 %v1073
    %v1610 = vunpack.c.l.b16 %v1074
    %v1611 = vunpack.c.h.b16 %v1074
    %v1612 = vunpack.c.l.b16 %v1075
    %v1613 = vunpack.c.h.b16 %v1075
    %v1614 = vunpack.c.l.b16 %v1076
    %v1615 = vunpack.c.h.b16 %v1076
    %v1616 = vunpack.c.l.b16 %v1077
    %v1617 = vunpack.c.h.b16 %v1077
    %v1618 = vunpack.c.l.b16 %v1078
    %v1619 = vunpack.c.h.b16 %v1078
    %v1620 = vunpack.c.l.b16 %v1079
    %v1621 = vunpack.c.h.b16 %v1079
    %v1622 = vunpack.c.l.b16 %v1080
    %v1623 = vunpack.c.h.b16 %v1080
    %v1624 = vunpack.c.l.b16 %v1081
    %v1625 = vunpack.c.h.b16 %v1081
    %v1626 = vunpack.c.l.b16 %v1082
    %v1627 = vunpack.c.h.b16 %v1082
    %v1628 = vunpack.c.l.b16 %v1083
    %v1629 = vunpack.c.h.b16 %v1083
    %v1630 = vunpack.c.l.b16 %v1084
    %v1631 = vunpack.c.h.b16 %v1084
    %v1632 = vunpack.c.l.b16 %v1085
    %v1633 = vunpack.c.h.b16 %v1085
    %v1634 = vunpack.c.l.b16 %v1086
    %v1635 = vunpack.c.h.b16 %v1086
    %v1636 = vunpack.c.l.b16 %v1087
    %v1637 = vunpack.c.h.b16 %v1087
    %v1638 = vunpack.c.l.b16 %v1088
    %v1639 = vunpack.c.h.b16 %v1088
    %v1640 = vunpack.c.l.b16 %v1089
    %v1641 = vunpack.c.h.b16 %v1089
    %v1642 = vunpack.c.l.b16 %v1090
    %v1643 = vunpack.c.h.b16 %v1090
    %v1644 = vunpack.c.l.b16 %v1091
    %v1645 = vunpack.c.h.b16 %v1091
    %v1646 = vunpack.c.l.b16 %v1092
    %v1647 = vunpack.c.h.b16 %v1092
    %v1648 = vunpack.c.l.b16 %v1093
    %v1649 = vunpack.c.h.b16 %v1093
    %v1650 = vunpack.c.l.b16 %v1094
    %v1651 = vunpack.c.h.b16 %v1094
    %v1652 = vunpack.c.l.b16 %v1095
    %v1653 = vunpack.c.h.b16 %v1095
    %v1654 = vunpack.c.l.b16 %v1096
    %v1655 = vunpack.c.h.b16 %v1096
    %v1656 = vunpack.c.l.b16 %v1097
    %v1657 = vunpack.c.h.b16 %v1097
    %v1658 = vunpack.c.l.b16 %v1098
    %v1659 = vunpack.c.h.b16 %v1098
    %v1660 = vunpack.c.l.b16 %v1099
    %v1661 = vunpack.c.h.b16 %v1099
    %v1662 = vunpack.c.l.b16 %v1100
    %v1663 = vunpack.c.h.b16 %v1100
    %v1664 = vunpack.c.l.b16 %v1101
    %v1665 = vunpack.c.h.b16 %v1101
    %v1666 = vunpack.c.l.b16 %v1102
    %v1667 = vunpack.c.h.b16 %v1102
    %v1668 = vunpack.c.l.b16 %v1103
    %v1669 = vunpack.c.h.b16 %v1103
    %v1670 = vunpack.c.l.b16 %v1104
    %v1671 = vunpack.c.h.b16 %v1104
    %v1672 = vunpack.c.l.b16 %v1105
    %v1673 = vunpack.c.h.b16 %v1105
    %v1674 = vunpack.c.l.b16 %v1106
    %v1675 = vunpack.c.h.b16 %v1106
    %v1676 = vunpack.c.l.b16 %v1107
    %v1677 = vunpack.c.h.b16 %v1107
    %v1678 = vunpack.c.l.b16 %v1108
    %v1679 = vunpack.c.h.b16 %v1108
    %v1680 = vunpack.c.l.b16 %v1109
    %v1681 = vunpack.c.h.b16 %v1109
    %v1682 = vunpack.c.l.b16 %v1110
    %v1683 = vunpack.c.h.b16 %v1110
    %v1684 = vunpack.c.l.b16 %v1111
    %v1685 = vunpack.c.h.b16 %v1111
    %v1686 = vunpack.c.l.b16 %v1112
    %v1687 = vunpack.c.h.b16 %v1112
    %v1688 = vunpack.c.l.b16 %v1113
    %v1689 = vunpack.c.h.b16 %v1113
    %v1690 = vunpack.c.l.b16 %v1114
    %v1691 = vunpack.c.h.b16 %v1114
    %v1692 = vunpack.c.l.b16 %v1115
    %v1693 = vunpack.c.h.b16 %v1115
    %v1694 = vunpack.c.l.b16 %v1116
    %v1695 = vunpack.c.h.b16 %v1116
    %v1696 = vunpack.c.l.b16 %v1117
    %v1697 = vunpack.c.h.b16 %v1117
    %v1698 = vunpack.c.l.b16 %v1118
    %v1699 = vunpack.c.h.b16 %v1118
    %v1700 = vunpack.c.l.b16 %v1119
    %v1701 = vunpack.c.h.b16 %v1119
    %v1702 = vunpack.c.l.b16 %v1120
    %v1703 = vunpack.c.h.b16 %v1120
    %v1704 = vunpack.c.l.b16 %v1121
    %v1705 = vunpack.c.h.b16 %v1121
    %v1706 = vunpack.c.l.b16 %v1122
    %v1707 = vunpack.c.h.b16 %v1122
    %v1708 = vunpack.c.l.b16 %v1123
    %v1709 = vunpack.c.h.b16 %v1123
    %v1710 = vunpack.c.l.b16 %v1124
    %v1711 = vunpack.c.h.b16 %v1124
    %v1712 = vunpack.c.l.b16 %v1125
    %v1713 = vunpack.c.h.b16 %v1125
    %v1714 = vunpack.c.l.b16 %v1126
    %v1715 = vunpack.c.h.b16 %v1126
    %v1716 = vunpack.c.l.b16 %v1127
    %v1717 = vunpack.c.h.b16 %v1127
    %v1718 = vunpack.c.l.b16 %v1128
    %v1719 = vunpack.c.h.b16 %v1128
    %v1720 = vunpack.c.l.b16 %v1129
    %v1721 = vunpack.c.h.b16 %v1129
    %v1722 = vunpack.c.l.b16 %v1130
    %v1723 = vunpack.c.h.b16 %v1130
    %v1724 = vunpack.c.l.b16 %v1131
    %v1725 = vunpack.c.h.b16 %v1131
    %v1726 = vunpack.c.l.b16 %v1132
    %v1727 = vunpack.c.h.b16 %v1132
    %v1728 = vunpack.c.l.b16 %v1133
    %v1729 = vunpack.c.h.b16 %v1133
    %v1730 = vunpack.c.l.b16 %v1134
    %v1731 = vunpack.c.h.b16 %v1134
    %v1732 = vunpack.c.l.b16 %v1135
    %v1733 = vunpack.c.h.b16 %v1135
    %v1734 = vunpack.c.l.b16 %v1136
    %v1735 = vunpack.c.h.b16 %v1136
    %v1736 = vunpack.c.l.b16 %v1137
    %v1737 = vunpack.c.h.b16 %v1137
    %v1738 = vunpack.c.l.b16 %v1138
    %v1739 = vunpack.c.h.b16 %v1138
    %v1740 = vunpack.c.l.b16 %v1139
    %v1741 = vunpack.c.h.b16 %v1139
    %v1742 = vunpack.c.l.b16 %v1140
    %v1743 = vunpack.c.h.b16 %v1140
    %v1744 = vunpack.c.l.b16 %v1141
    %v1745 = vunpack.c.h.b16 %v1141
    %v1746 = vunpack.c.l.b16 %v1142
    %v1747 = vunpack.c.h.b16 %v1142
    %v1748 = vunpack.c.l.b16 %v1143
    %v1749 = vunpack.c.h.b16 %v1143
    %v1750 = vunpack.c.l.b16 %v1144
    %v1751 = vunpack.c.h.b16 %v1144
    %v1752 = vunpack.c.l.b16 %v1145
    %v1753 = vunpack.c.h.b16 %v1145
    %v1754 = vunpack.c.l.b16 %v1146
    %v1755 = vunpack.c.h.b16 %v1146
    %v1756 = vunpack.c.l.b16 %v1147
    %v1757 = vunpack.c.h.b16 %v1147
    %v1758 = vunpack.c.l.b16 %v1148
    %v1759 = vunpack.c.h.b16 %v1148
    %v1760 = vunpack.c.l.b16 %v1149
    %v1761 = vunpack.c.h.b16 %v1149
    %v1762 = vunpack.c.l.b16 %v1150
    %v1763 = vunpack.c.h.b16 %v1150
    %v1764 = vunpack.c.l.b16 %v1151
    %v1765 = vunpack.c.h.b16 %v1151
    %v1766 = vunpack.c.l.b16 %v1152
    %v1767 = vunpack.c.h.b16 %v1152
    %v1768 = vunpack.c.l.b16 %v1153
    %v1769 = vunpack.c.h.b16 %v1153
    %v1770 = vunpack.c.l.b16 %v1154
    %v1771 = vunpack.c.h.b16 %v1154
    %v1772 = vunpack.c.l.b16 %v1155
    %v1773 = vunpack.c.h.b16 %v1155
    %v1774 = vunpack.c.l.b16 %v1156
    %v1775 = vunpack.c.h.b16 %v1156
    %v1776 = vunpack.c.l.b16 %v1157
    %v1777 = vunpack.c.h.b16 %v1157
    %v1778 = vunpack.c.l.b16 %v1158
    %v1779 = vunpack.c.h.b16 %v1158
    %v1780 = vunpack.c.l.b16 %v1159
    %v1781 = vunpack.c.h.b16 %v1159
    %v1782 = vunpack.c.l.b16 %v1160
    %v1783 = vunpack.c.h.b16 %v1160
    %v1784 = vunpack.c.l.b16 %v1161
    %v1785 = vunpack.c.h.b16 %v1161
    %v1786 = vunpack.c.l.b16 %v1162
    %v1787 = vunpack.c.h.b16 %v1162
    %v1788 = vunpack.c.l.b16 %v1163
    %v1789 = vunpack.c.h.b16 %v1163
    %v1790 = vunpack.c.l.b16 %v1164
    %v1791 = vunpack.c.h.b16 %v1164
    %v1792 = vunpack.c.l.b16 %v1165
    %v1793 = vunpack.c.h.b16 %v1165
    %v1794 = vunpack.c.l.b16 %v1166
    %v1795 = vunpack.c.h.b16 %v1166
    %v1796 = vunpack.c.l.b16 %v1167
    %v1797 = vunpack.c.h.b16 %v1167
    %v1798 = vunpack.c.l.b16 %v1168
    %v1799 = vunpack.c.h.b16 %v1168
    %v1800 = vunpack.c.l.b16 %v1169
    %v1801 = vunpack.c.h.b16 %v1169
    %v1802 = vunpack.c.l.b16 %v1170
    %v1803 = vunpack.c.h.b16 %v1170
    %v1804 = vunpack.c.l.b16 %v1171
    %v1805 = vunpack.c.h.b16 %v1171
    %v1806 = vunpack.c.l.b16 %v1172
    %v1807 = vunpack.c.h.b16 %v1172
    %v1808 = vunpack.c.l.b16 %v1173
    %v1809 = vunpack.c.h.b16 %v1173
    %v1810 = vunpack.c.l.b16 %v1174
    %v1811 = vunpack.c.h.b16 %v1174
    %v1812 = vunpack.c.l.b16 %v1175
    %v1813 = vunpack.c.h.b16 %v1175
    %v1814 = vunpack.c.l.b16 %v1176
    %v1815 = vunpack.c.h.b16 %v1176
    %v1816 = vunpack.c.l.b16 %v1177
    %v1817 = vunpack.c.h.b16 %v1177
    %v1818 = vunpack.c.l.b16 %v1178
    %v1819 = vunpack.c.h.b16 %v1178
    %v1820 = vunpack.c.l.b16 %v1179
    %v1821 = vunpack.c.h.b16 %v1179
    %v1822 = vunpack.c.l.b16 %v1180
    %v1823 = vunpack.c.h.b16 %v1180
    %v1824 = vunpack.c.l.b16 %v1181
    %v1825 = vunpack.c.h.b16 %v1181
    %v1826 = vunpack.c.l.b16 %v1182
    %v1827 = vunpack.c.h.b16 %v1182
    %v1828 = vunpack.c.l.b16 %v1183
    %v1829 = vunpack.c.h.b16 %v1183
    %v1830 = vunpack.c.l.b16 %v1184
    %v1831 = vunpack.c.h.b16 %v1184
    %v1832 = vunpack.c.l.b16 %v1185
    %v1833 = vunpack.c.h.b16 %v1185
    %v1834 = vunpack.c.l.b16 %v1186
    %v1835 = vunpack.c.h.b16 %v1186
    %v1836 = vunpack.c.l.b16 %v1187
    %v1837 = vunpack.c.h.b16 %v1187
    %v1838 = vunpack.c.l.b16 %v1188
    %v1839 = vunpack.c.h.b16 %v1188
    %v1840 = vunpack.c.l.b16 %v1189
    %v1841 = vunpack.c.h.b16 %v1189
    %v1842 = vunpack.c.l.b16 %v1190
    %v1843 = vunpack.c.h.b16 %v1190
    %v1844 = vunpack.c.l.b16 %v1191
    %v1845 = vunpack.c.h.b16 %v1191
    %v1846 = vunpack.c.l.b16 %v1192
    %v1847 = vunpack.c.h.b16 %v1192
    %v1848 = vunpack.c.l.b16 %v1193
    %v1849 = vunpack.c.h.b16 %v1193
    %v1850 = vunpack.c.l.b16 %v1194
    %v1851 = vunpack.c.h.b16 %v1194
    %v1852 = vunpack.c.l.b16 %v1195
    %v1853 = vunpack.c.h.b16 %v1195
    %v1854 = vunpack.c.l.b16 %v1196
    %v1855 = vunpack.c.h.b16 %v1196
    %v1856 = vunpack.c.l.b16 %v1197
    %v1857 = vunpack.c.h.b16 %v1197
    %v1858 = vunpack.c.l.b16 %v1198
    %v1859 = vunpack.c.h.b16 %v1198
    %v1860 = vunpack.c.l.b16 %v1199
    %v1861 = vunpack.c.h.b16 %v1199
    %v1862 = vunpack.c.l.b16 %v1200
    %v1863 = vunpack.c.h.b16 %v1200
    %v1864 = vunpack.c.l.b16 %v1201
    %v1865 = vunpack.c.h.b16 %v1201
    %v1866 = vunpack.c.l.b16 %v1202
    %v1867 = vunpack.c.h.b16 %v1202
    %v1868 = vunpack.c.l.b16 %v1203
    %v1869 = vunpack.c.h.b16 %v1203
    %v1870 = vunpack.c.l.b16 %v1204
    %v1871 = vunpack.c.h.b16 %v1204
    %v1872 = vunpack.c.l.b16 %v1205
    %v1873 = vunpack.c.h.b16 %v1205
    %v1874 = vunpack.c.l.b16 %v1206
    %v1875 = vunpack.c.h.b16 %v1206
    %v1876 = vunpack.c.l.b16 %v1207
    %v1877 = vunpack.c.h.b16 %v1207
    %v1878 = vunpack.c.l.b16 %v1208
    %v1879 = vunpack.c.h.b16 %v1208
    %v1880 = vunpack.c.l.b16 %v1209
    %v1881 = vunpack.c.h.b16 %v1209
    %v1882 = vunpack.c.l.b16 %v1210
    %v1883 = vunpack.c.h.b16 %v1210
    %v1884 = vunpack.c.l.b16 %v1211
    %v1885 = vunpack.c.h.b16 %v1211
    %v1886 = vunpack.c.l.b16 %v1212
    %v1887 = vunpack.c.h.b16 %v1212
    %v1888 = vunpack.c.l.b16 %v1213
    %v1889 = vunpack.c.h.b16 %v1213
    %v1890 = vunpack.c.l.b16 %v1214
    %v1891 = vunpack.c.h.b16 %v1214
    %v1892 = vunpack.c.l.b16 %v1215
    %v1893 = vunpack.c.h.b16 %v1215
    %v1894 = vunpack.c.l.b16 %v1216
    %v1895 = vunpack.c.h.b16 %v1216
    %v1896 = vunpack.c.l.b16 %v1217
    %v1897 = vunpack.c.h.b16 %v1217
    %v1898 = vunpack.c.l.b16 %v1218
    %v1899 = vunpack.c.h.b16 %v1218
    %v1900 = vunpack.c.l.b16 %v1219
    %v1901 = vunpack.c.h.b16 %v1219
    %v1902 = vunpack.c.l.b16 %v1220
    %v1903 = vunpack.c.h.b16 %v1220
    %v1904 = vunpack.c.l.b16 %v1221
    %v1905 = vunpack.c.h.b16 %v1221
    %v1906 = vunpack.c.l.b16 %v1222
    %v1907 = vunpack.c.h.b16 %v1222
    %v1908 = vunpack.c.l.b16 %v1223
    %v1909 = vunpack.c.h.b16 %v1223
    %v1910 = vunpack.c.l.b16 %v1224
    %v1911 = vunpack.c.h.b16 %v1224
    %v1912 = vunpack.c.l.b16 %v1225
    %v1913 = vunpack.c.h.b16 %v1225
    %v1914 = vunpack.c.l.b16 %v1226
    %v1915 = vunpack.c.h.b16 %v1226
    %v1916 = vunpack.c.l.b16 %v1227
    %v1917 = vunpack.c.h.b16 %v1227
    %v1918 = vunpack.c.l.b16 %v1228
    %v1919 = vunpack.c.h.b16 %v1228
    %v1920 = vunpack.c.l.b16 %v1229
    %v1921 = vunpack.c.h.b16 %v1229
    %v1922 = vunpack.c.l.b16 %v1230
    %v1923 = vunpack.c.h.b16 %v1230
    %v1924 = vunpack.c.l.b16 %v1231
    %v1925 = vunpack.c.h.b16 %v1231
    %v1926 = vunpack.c.l.b16 %v1232
    %v1927 = vunpack.c.h.b16 %v1232
    %v1928 = vunpack.c.l.b16 %v1233
    %v1929 = vunpack.c.h.b16 %v1233
    %v1930 = vunpack.c.l.b16 %v1234
    %v1931 = vunpack.c.h.b16 %v1234
    %v1932 = vunpack.c.l.b16 %v1235
    %v1933 = vunpack.c.h.b16 %v1235
    %v1934 = vunpack.c.l.b16 %v1236
    %v1935 = vunpack.c.h.b16 %v1236
    %v1936 = vunpack.c.l.b16 %v1237
    %v1937 = vunpack.c.h.b16 %v1237
    %v1938 = vunpack.c.l.b16 %v1238
    %v1939 = vunpack.c.h.b16 %v1238
    %v1940 = vunpack.c.l.b16 %v1239
    %v1941 = vunpack.c.h.b16 %v1239
    %v1942 = vunpack.c.l.b16 %v1240
    %v1943 = vunpack.c.h.b16 %v1240
    %v1944 = vunpack.c.l.b16 %v1241
    %v1945 = vunpack.c.h.b16 %v1241
    %v1946 = vunpack.c.l.b16 %v1242
    %v1947 = vunpack.c.h.b16 %v1242
    %v1948 = vunpack.c.l.b16 %v1243
    %v1949 = vunpack.c.h.b16 %v1243
    %v1950 = vunpack.c.l.b16 %v1244
    %v1951 = vunpack.c.h.b16 %v1244
    %v1952 = vunpack.c.l.b16 %v1245
    %v1953 = vunpack.c.h.b16 %v1245
    %v1954 = vunpack.c.l.b16 %v1246
    %v1955 = vunpack.c.h.b16 %v1246
    %v1956 = vunpack.c.l.b16 %v1247
    %v1957 = vunpack.c.h.b16 %v1247
    %v1958 = vunpack.c.l.b16 %v1248
    %v1959 = vunpack.c.h.b16 %v1248
    %v1960 = vunpack.c.l.b16 %v1249
    %v1961 = vunpack.c.h.b16 %v1249
    %v1962 = vunpack.c.l.b16 %v1250
    %v1963 = vunpack.c.h.b16 %v1250
    %v1964 = vunpack.c.l.b16 %v1251
    %v1965 = vunpack.c.h.b16 %v1251
    %v1966 = vunpack.c.l.b16 %v1252
    %v1967 = vunpack.c.h.b16 %v1252
    %v1968 = vunpack.c.l.b16 %v1253
    %v1969 = vunpack.c.h.b16 %v1253
    %v1970 = vunpack.c.l.b16 %v1254
    %v1971 = vunpack.c.h.b16 %v1254
    %v1972 = vunpack.c.l.b16 %v1255
    %v1973 = vunpack.c.h.b16 %v1255
    %v1974 = vunpack.c.l.b16 %v1256
    %v1975 = vunpack.c.h.b16 %v1256
    %v1976 = vunpack.c.l.b16 %v1257
    %v1977 = vunpack.c.h.b16 %v1257
    %v1978 = vunpack.c.l.b16 %v1258
    %v1979 = vunpack.c.h.b16 %v1258
    %v1980 = vunpack.c.l.b16 %v1259
    %v1981 = vunpack.c.h.b16 %v1259
    %v1982 = vunpack.c.l.b16 %v1260
    %v1983 = vunpack.c.h.b16 %v1260
    %v1984 = vunpack.c.l.b16 %v1261
    %v1985 = vunpack.c.h.b16 %v1261
    %v1986 = vunpack.c.l.b16 %v1262
    %v1987 = vunpack.c.h.b16 %v1262
    %v1988 = vunpack.c.l.b16 %v1263
    %v1989 = vunpack.c.h.b16 %v1263
    %v1990 = vunpack.c.l.b16 %v1264
    %v1991 = vunpack.c.h.b16 %v1264
    %v1992 = vunpack.c.l.b16 %v1265
    %v1993 = vunpack.c.h.b16 %v1265
    %v1994 = vunpack.c.l.b16 %v1266
    %v1995 = vunpack.c.h.b16 %v1266
    %v1996 = vunpack.c.l.b16 %v1267
    %v1997 = vunpack.c.h.b16 %v1267
    %v1998 = vunpack.c.l.b16 %v1268
    %v1999 = vunpack.c.h.b16 %v1268
    %v2000 = vunpack.c.l.b16 %v1269
    %v2001 = vunpack.c.h.b16 %v1269
    %v2002 = vunpack.c.l.b16 %v1270
    %v2003 = vunpack.c.h.b16 %v1270
    %v2004 = vunpack.c.l.b16 %v1271
    %v2005 = vunpack.c.h.b16 %v1271
    %v2006 = vunpack.c.l.b16 %v1272
    %v2007 = vunpack.c.h.b16 %v1272
    %v2008 = vunpack.c.l.b16 %v1273
    %v2009 = vunpack.c.h.b16 %v1273
    %v2010 = vunpack.c.l.b16 %v1274
    %v2011 = vunpack.c.h.b16 %v1274
    %v2012 = vunpack.c.l.b16 %v1275
    %v2013 = vunpack.c.h.b16 %v1275
    %v2014 = vunpack.c.l.b16 %v1276
    %v2015 = vunpack.c.h.b16 %v1276
    %v2016 = vunpack.c.l.b16 %v1277
    %v2017 = vunpack.c.h.b16 %v1277
    %v2018 = vunpack.c.l.b16 %v1278
    %v2019 = vunpack.c.h.b16 %v1278
    %v2020 = vunpack.c.l.b16 %v1279
    %v2021 = vunpack.c.h.b16 %v1279
    %v2022 = vunpack.c.l.b16 %v1280
    %v2023 = vunpack.c.h.b16 %v1280
    %v2024 = vunpack.c.l.b16 %v1281
    %v2025 = vunpack.c.h.b16 %v1281
    %v2026 = vunpack.c.l.b16 %v1282
    %v2027 = vunpack.c.h.b16 %v1282
    %v2028 = vunpack.c.l.b16 %v1283
    %v2029 = vunpack.c.h.b16 %v1283
    %v2030 = vunpack.c.l.b16 %v1284
    %v2031 = vunpack.c.h.b16 %v1284
    %v2032 = vunpack.c.l.b16 %v1285
    %v2033 = vunpack.c.h.b16 %v1285
    %v2034 = vunpack.c.l.b16 %v1286
    %v2035 = vunpack.c.h.b16 %v1286
    %v2036 = vunpack.c.l.b16 %v1287
    %v2037 = vunpack.c.h.b16 %v1287
    %v2038 = vunpack.c.l.b16 %v1288
    %v2039 = vunpack.c.h.b16 %v1288
    %v2040 = vunpack.c.l.b16 %v1289
    %v2041 = vunpack.c.h.b16 %v1289
    %v2042 = vunpack.c.l.b16 %v1290
    %v2043 = vunpack.c.h.b16 %v1290
    %v2044 = vunpack.c.l.b16 %v1291
    %v2045 = vunpack.c.h.b16 %v1291
    %v2046 = vunpack.c.l.b16 %v1292
    %v2047 = vunpack.c.h.b16 %v1292
    %v2048 = vunpack.c.l.b16 %v1293
    %v2049 = vunpack.c.h.b16 %v1293
    %v2050 = vunpack.c.l.b16 %v1294
    %v2051 = vunpack.c.h.b16 %v1294
    %v2052 = vunpack.c.l.b16 %v1295
    %v2053 = vunpack.c.h.b16 %v1295
    %v2054 = vunpack.c.l.b16 %v1296
    %v2055 = vunpack.c.h.b16 %v1296
    %v2056 = vunpack.c.l.b16 %v1297
    %v2057 = vunpack.c.h.b16 %v1297
    %v2058 = vunpack.c.l.b16 %v1298
    %v2059 = vunpack.c.h.b16 %v1298
    %v2060 = vunpack.c.l.b16 %v1299
    %v2061 = vunpack.c.h.b16 %v1299
    %v2062 = vunpack.c.l.b16 %v1300
    %v2063 = vunpack.c.h.b16 %v1300
    %v2064 = vunpack.c.l.b16 %v1301
    %v2065 = vunpack.c.h.b16 %v1301
    %v2066 = vunpack.c.l.b16 %v1302
    %v2067 = vunpack.c.h.b16 %v1302
    %v2068 = vunpack.c.l.b16 %v1303
    %v2069 = vunpack.c.h.b16 %v1303
    %v2070 = vunpack.c.l.b16 %v1304
    %v2071 = vunpack.c.h.b16 %v1304
    %v2072 = vunpack.c.l.b16 %v1305
    %v2073 = vunpack.c.h.b16 %v1305
    %v2074 = vunpack.c.l.b16 %v1306
    %v2075 = vunpack.c.h.b16 %v1306
    %v2076 = vunpack.c.l.b16 %v1307
    %v2077 = vunpack.c.h.b16 %v1307
    %v2078 = vunpack.c.l.b16 %v1308
    %v2079 = vunpack.c.h.b16 %v1308
    %v2080 = vunpack.c.l.b16 %v1309
    %v2081 = vunpack.c.h.b16 %v1309
    %v2082 = vunpack.c.l.b16 %v1310
    %v2083 = vunpack.c.h.b16 %v1310
    %v2084 = vunpack.c.l.b16 %v1311
    %v2085 = vunpack.c.h.b16 %v1311
    %v2086 = vunpack.c.l.b16 %v1312
    %v2087 = vunpack.c.h.b16 %v1312
    %v2088 = vunpack.c.l.b16 %v1313
    %v2089 = vunpack.c.h.b16 %v1313
    %v2090 = vunpack.c.l.b16 %v1314
    %v2091 = vunpack.c.h.b16 %v1314
    %v2092 = vunpack.c.l.b16 %v1315
    %v2093 = vunpack.c.h.b16 %v1315
    %v2094 = vunpack.c.l.b16 %v1316
    %v2095 = vunpack.c.h.b16 %v1316
    %v2096 = vunpack.c.l.b16 %v1317
    %v2097 = vunpack.c.h.b16 %v1317
    %v2098 = vunpack.c.l.b16 %v1318
    %v2099 = vunpack.c.h.b16 %v1318
    %v2100 = vunpack.c.l.b16 %v1319
    %v2101 = vunpack.c.h.b16 %v1319
    %v2102 = vunpack.c.l.b16 %v1320
    %v2103 = vunpack.c.h.b16 %v1320
    %v2104 = vunpack.c.l.b16 %v1321
    %v2105 = vunpack.c.h.b16 %v1321
    %v2106 = vunpack.c.l.b16 %v1322
    %v2107 = vunpack.c.h.b16 %v1322
    %v2108 = vunpack.c.l.b16 %v1323
    %v2109 = vunpack.c.h.b16 %v1323
    %v2110 = vunpack.c.l.b16 %v1324
    %v2111 = vunpack.c.h.b16 %v1324
    %v2112 = vunpack.c.l.b16 %v1325
    %v2113 = vunpack.c.h.b16 %v1325
    %v2114 = vunpack.c.l.b16 %v1326
    %v2115 = vunpack.c.h.b16 %v1326
    %v2116 = vunpack.c.l.b16 %v1327
    %v2117 = vunpack.c.h.b16 %v1327
    %v2118 = vpack.c.b16 %v1610, %v1606
    %v2119 = vpack.c.b16 %v1611, %v1607
    %v2120 = vpack.c.b16 %v1612, %v1608
    %v2121 = vpack.c.b16 %v1613, %v1609
    %v2122 = vpack.c.b16 %v1618, %v1614
    %v2123 = vpack.c.b16 %v1619, %v1615
    %v2124 = vpack.c.b16 %v1620, %v1616
    %v2125 = vpack.c.b16 %v1621, %v1617
    %v2126 = vpack.c.b16 %v1626, %v1622
    %v2127 = vpack.c.b16 %v1627, %v1623
    %v2128 = vpack.c.b16 %v1628, %v1624
    %v2129 = vpack.c.b16 %v1629, %v1625
    %v2130 = vpack.c.b16 %v1634, %v1630
    %v2131 = vpack.c.b16 %v1635, %v1631
    %v2132 = vpack.c.b16 %v1636, %v1632
    %v2133 = vpack.c.b16 %v1637, %v1633
    %v2134 = vpack.c.b16 %v1642, %v1638
    %v2135 = vpack.c.b16 %v1643, %v1639
    %v2136 = vpack.c.b16 %v1644, %v1640
    %v2137 = vpack.c.b16 %v1645, %v1641
    %v2138 = vpack.c.b16 %v1650, %v1646
    %v2139 = vpack.c.b16 %v1651, %v1647
    %v2140 = vpack.c.b16 %v1652, %v1648
    %v2141 = vpack.c.b16 %v1653, %v1649
    %v2142 = vpack.c.b16 %v1658, %v1654
    %v2143 = vpack.c.b16 %v1659, %v1655
    %v2144 = vpack.c.b16 %v1660, %v1656
    %v2145 = vpack.c.b16 %v1661, %v1657
    %v2146 = vpack.c.b16 %v1666, %v1662
    %v2147 = vpack.c.b16 %v1667, %v1663
    %v2148 = vpack.c.b16 %v1668, %v1664
    %v2149 = vpack.c.b16 %v1669, %v1665
    %v2150 = vpack.c.b16 %v1674, %v1670
    %v2151 = vpack.c.b16 %v1675, %v1671
    %v2152 = vpack.c.b16 %v1676, %v1672
    %v2153 = vpack.c.b16 %v1677, %v1673
    %v2154 = vpack.c.b16 %v1682, %v1678
    %v2155 = vpack.c.b16 %v1683, %v1679
    %v2156 = vpack.c.b16 %v1684, %v1680
    %v2157 = vpack.c.b16 %v1685, %v1681
    %v2158 = vpack.c.b16 %v1690, %v1686
    %v2159 = vpack.c.b16 %v1691, %v1687
    %v2160 = vpack.c.b16 %v1692, %v1688
    %v2161 = vpack.c.b16 %v1693, %v1689
    %v2162 = vpack.c.b16 %v1698, %v1694
    %v2163 = vpack.c.b16 %v1699, %v1695
    %v2164 = vpack.c.b16 %v1700, %v1696
    %v2165 = vpack.c.b16 %v1701, %v1697
    %v2166 = vpack.c.b16 %v1706, %v1702
    %v2167 = vpack.c.b16 %v1707, %v1703
    %v2168 = vpack.c.b16 %v1708, %v1704
    %v2169 = vpack.c.b16 %v1709, %v1705
    %v2170 = vpack.c.b16 %v1714, %v1710
    %v2171 = vpack.c.b16 %v1715, %v1711
    %v2172 = vpack.c.b16 %v1716, %v1712
    %v2173 = vpack.c.b16 %v1717, %v1713
    %v2174 = vpack.c.b16 %v1722, %v1718
    %v2175 = vpack.c.b16 %v1723, %v1719
    %v2176 = vpack.c.b16 %v1724, %v1720
    %v2177 = vpack.c.b16 %v1725, %v1721
    %v2178 = vpack.c.b16 %v1730, %v1726
    %v2179 = vpack.c.b16 %v1731, %v1727
    %v2180 = vpack.c.b16 %v1732, %v1728
    %v2181 = vpack.c.b16 %v1733, %v1729
    %v2182 = vpack.c.b16 %v1738, %v1734
    %v2183 = vpack.c.b16 %v1739, %v1735
    %v2184 = vpack.c.b16 %v1740, %v1736
    %v2185 = vpack.c.b16 %v1741, %v1737
    %v2186 = vpack.c.b16 %v1746, %v1742
    %v2187 = vpack.c.b16 %v1747, %v1743
    %v2188 = vpack.c.b16 %v1748, %v1744
    %v2189 = vpack.c.b16 %v1749, %v1745
    %v2190 = vpack.c.b16 %v1754, %v1750
    %v2191 = vpack.c.b16 %v1755, %v1751
    %v2192 = vpack.c.b16 %v1756, %v1752
    %v2193 = vpack.c.b16 %v1757, %v1753
    %v2194 = vpack.c.b16 %v1762, %v1758
    %v2195 = vpack.c.b16 %v1763, %v1759
    %v2196 = vpack.c.b16 %v1764, %v1760
    %v2197 = vpack.c.b16 %v1765, %v1761
    %v2198 = vpack.c.b16 %v1770, %v1766
    %v2199 = vpack.c.b16 %v1771, %v1767
    %v2200 = vpack.c.b16 %v1772, %v1768
    %v2201 = vpack.c.b16 %v1773, %v1769
    %v2202 = vpack.c.b16 %v1778, %v1774
    %v2203 = vpack.c.b16 %v1779, %v1775
    %v2204 = vpack.c.b16 %v1780, %v1776
    %v2205 = vpack.c.b16 %v1781, %v1777
    %v2206 = vpack.c.b16 %v1786, %v1782
    %v2207 = vpack.c.b16 %v1787, %v1783
    %v2208 = vpack.c.b16 %v1788, %v1784
    %v2209 = vpack.c.b16 %v1789, %v1785
    %v2210 = vpack.c.b16 %v1794, %v1790
    %v2211 = vpack.c.b16 %v1795, %v1791
    %v2212 = vpack.c.b16 %v1796, %v1792
    %v2213 = vpack.c.b16 %v1797, %v1793
    %v2214 = vpack.c.b16 %v1802, %v1798
    %v2215 = vpack.c.b16 %v1803, %v1799
    %v2216 = vpack.c.b16 %v1804, %v1800
    %v2217 = vpack.c.b16 %v1805, %v1801
    %v2218 = vpack.c.b16 %v1810, %v1806
    %v2219 = vpack.c.b16 %v1811, %v1807
    %v2220 = vpack.c.b16 %v1812, %v1808
    %v2221 = vpack.c.b16 %v1813, %v1809
    %v2222 = vpack.c.b16 %v1818, %v1814
    %v2223 = vpack.c.b16 %v1819, %v1815
    %v2224 = vpack.c.b16 %v1820, %v1816
    %v2225 = vpack.c.b16 %v1821, %v1817
    %v2226 = vpack.c.b16 %v1826, %v1822
    %v2227 = vpack.c.b16 %v1827, %v1823
    %v2228 = vpack.c.b16 %v1828, %v1824
    %v2229 = vpack.c.b16 %v1829, %v1825
    %v2230 = vpack.c.b16 %v1834, %v1830
    %v2231 = vpack.c.b16 %v1835, %v1831
    %v2232 = vpack.c.b16 %v1836, %v1832
    %v2233 = vpack.c.b16 %v1837, %v1833
    %v2234 = vpack.c.b16 %v1842, %v1838
    %v2235 = vpack.c.b16 %v1843, %v1839
    %v2236 = vpack.c.b16 %v1844, %v1840
    %v2237 = vpack.c.b16 %v1845, %v1841
    %v2238 = vpack.c.b16 %v1850, %v1846
    %v2239 = vpack.c.b16 %v1851, %v1847
    %v2240 = vpack.c.b16 %v1852, %v1848
    %v2241 = vpack.c.b16 %v1853, %v1849
    %v2242 = vpack.c.b16 %v1858, %v1854
    %v2243 = vpack.c.b16 %v1859, %v1855
    %v2244 = vpack.c.b16 %v1860, %v1856
    %v2245 = vpack.c.b16 %v1861, %v1857
    %v2246 = vpack.c.b16 %v1866, %v1862
    %v2247 = vpack.c.b16 %v1867, %v1863
    %v2248 = vpack.c.b16 %v1868, %v1864
    %v2249 = vpack.c.b16 %v1869, %v1865
    %v2250 = vpack.c.b16 %v1874, %v1870
    %v2251 = vpack.c.b16 %v1875, %v1871
    %v2252 = vpack.c.b16 %v1876, %v1872
    %v2253 = vpack.c.b16 %v1877, %v1873
    %v2254 = vpack.c.b16 %v1882, %v1878
    %v2255 = vpack.c.b16 %v1883, %v1879
    %v2256 = vpack.c.b16 %v1884, %v1880
    %v2257 = vpack.c.b16 %v1885, %v1881
    %v2258 = vpack.c.b16 %v1890, %v1886
    %v2259 = vpack.c.b16 %v1891, %v1887
    %v2260 = vpack.c.b16 %v1892, %v1888
    %v2261 = vpack.c.b16 %v1893, %v1889
    %v2262 = vpack.c.b16 %v1898, %v1894
    %v2263 = vpack.c.b16 %v1899, %v1895
    %v2264 = vpack.c.b16 %v1900, %v1896
    %v2265 = vpack.c.b16 %v1901, %v1897
    %v2266 = vpack.c.b16 %v1906, %v1902
    %v2267 = vpack.c.b16 %v1907, %v1903
    %v2268 = vpack.c.b16 %v1908, %v1904
    %v2269 = vpack.c.b16 %v1909, %v1905
    %v2270 = vpack.c.b16 %v1914, %v1910
    %v2271 = vpack.c.b16 %v1915, %v1911
    %v2272 = vpack.c.b16 %v1916, %v1912
    %v2273 = vpack.c.b16 %v1917, %v1913
    %v2274 = vpack.c.b16 %v1922, %v1918
    %v2275 = vpack.c.b16 %v1923, %v1919
    %v2276 = vpack.c.b16 %v1924, %v1920
    %v2277 = vpack.c.b16 %v1925, %v1921
    %v2278 = vpack.c.b16 %v1930, %v1926
    %v2279 = vpack.c.b16 %v1931, %v1927
    %v2280 = vpack.c.b16 %v1932, %v1928
    %v2281 = vpack.c.b16 %v1933, %v1929
    %v2282 = vpack.c.b16 %v1938, %v1934
    %v2283 = vpack.c.b16 %v1939, %v1935
    %v2284 = vpack.c.b16 %v1940, %v1936
    %v2285 = vpack.c.b16 %v1941, %v1937
    %v2286 = vpack.c.b16 %v1946, %v1942
    %v2287 = vpack.c.b16 %v1947, %v1943
    %v2288 = vpack.c.b16 %v1948, %v1944
    %v2289 = vpack.c.b16 %v1949, %v1945
    %v2290 = vpack.c.b16 %v1954, %v1950
    %v2291 = vpack.c.b16 %v1955, %v1951
    %v2292 = vpack.c.b16 %v1956, %v1952
    %v2293 = vpack.c.b16 %v1957, %v1953
    %v2294 = vpack.c.b16 %v1962, %v1958
    %v2295 = vpack.c.b16 %v1963, %v1959
    %v2296 = vpack.c.b16 %v1964, %v1960
    %v2297 = vpack.c.b16 %v1965, %v1961
    %v2298 = vpack.c.b16 %v1970, %v1966
    %v2299 = vpack.c.b16 %v1971, %v1967
    %v2300 = vpack.c.b16 %v1972, %v1968
    %v2301 = vpack.c.b16 %v1973, %v1969
    %v2302 = vpack.c.b16 %v1978, %v1974
    %v2303 = vpack.c.b16 %v1979, %v1975
    %v2304 = vpack.c.b16 %v1980, %v1976
    %v2305 = vpack.c.b16 %v1981, %v1977
    %v2306 = vpack.c.b16 %v1986, %v1982
    %v2307 = vpack.c.b16 %v1987, %v1983
    %v2308 = vpack.c.b16 %v1988, %v1984
    %v2309 = vpack.c.b16 %v1989, %v1985
    %v2310 = vpack.c.b16 %v1994, %v1990
    %v2311 = vpack.c.b16 %v1995, %v1991
    %v2312 = vpack.c.b16 %v1996, %v1992
    %v2313 = vpack.c.b16 %v1997, %v1993
    %v2314 = vpack.c.b16 %v2002, %v1998
    %v2315 = vpack.c.b16 %v2003, %v1999
    %v2316 = vpack.c.b16 %v2004, %v2000
    %v2317 = vpack.c.b16 %v2005, %v2001
    %v2318 = vpack.c.b16 %v2010, %v2006
    %v2319 = vpack.c.b16 %v2011, %v2007
    %v2320 = vpack.c.b16 %v2012, %v2008
    %v2321 = vpack.c.b16 %v2013, %v2009
    %v2322 = vpack.c.b16 %v2018, %v2014
    %v2323 = vpack.c.b16 %v2019, %v2015
    %v2324 = vpack.c.b16 %v2020, %v2016
    %v2325 = vpack.c.b16 %v2021, %v2017
    %v2326 = vpack.c.b16 %v2026, %v2022
    %v2327 = vpack.c.b16 %v2027, %v2023
    %v2328 = vpack.c.b16 %v2028, %v2024
    %v2329 = vpack.c.b16 %v2029, %v2025
    %v2330 = vpack.c.b16 %v2034, %v2030
    %v2331 = vpack.c.b16 %v2035, %v2031
    %v2332 = vpack.c.b16 %v2036, %v2032
    %v2333 = vpack.c.b16 %v2037, %v2033
    %v2334 = vpack.c.b16 %v2042, %v2038
    %v2335 = vpack.c.b16 %v2043, %v2039
    %v2336 = vpack.c.b16 %v2044, %v2040
    %v2337 = vpack.c.b16 %v2045, %v2041
    %v2338 = vpack.c.b16 %v2050, %v2046
    %v2339 = vpack.c.b16 %v2051, %v2047
    %v2340 = vpack.c.b16 %v2052, %v2048
    %v2341 = vpack.c.b16 %v2053, %v2049
    %v2342 = vpack.c.b16 %v2058, %v2054
    %v2343 = vpack.c.b16 %v2059, %v2055
    %v2344 = vpack.c.b16 %v2060, %v2056
    %v2345 = vpack.c.b16 %v2061, %v2057
    %v2346 = vpack.c.b16 %v2066, %v2062
    %v2347 = vpack.c.b16 %v2067, %v2063
    %v2348 = vpack.c.b16 %v2068, %v2064
    %v2349 = vpack.c.b16 %v2069, %v2065
    %v2350 = vpack.c.b16 %v2074, %v2070
    %v2351 = vpack.c.b16 %v2075, %v2071
    %v2352 = vpack.c.b16 %v2076, %v2072
    %v2353 = vpack.c.b16 %v2077, %v2073
    %v2354 = vpack.c.b16 %v2082, %v2078
    %v2355 = vpack.c.b16 %v2083, %v2079
    %v2356 = vpack.c.b16 %v2084, %v2080
    %v2357 = vpack.c.b16 %v2085, %v2081
    %v2358 = vpack.c.b16 %v2090, %v2086
    %v2359 = vpack.c.b16 %v2091, %v2087
    %v2360 = vpack.c.b16 %v2092, %v2088
    %v2361 = vpack.c.b16 %v2093, %v2089
    %v2362 = vpack.c.b16 %v2098, %v2094
    %v2363 = vpack.c.b16 %v2099, %v2095
    %v2364 = vpack.c.b16 %v2100, %v2096
    %v2365 = vpack.c.b16 %v2101, %v2097
    %v2366 = vpack.c.b16 %v2106, %v2102
    %v2367 = vpack.c.b16 %v2107, %v2103
    %v2368 = vpack.c.b16 %v2108, %v2104
    %v2369 = vpack.c.b16 %v2109, %v2105
    %v2370 = vpack.c.b16 %v2114, %v2110
    %v2371 = vpack.c.b16 %v2115, %v2111
    %v2372 = vpack.c.b16 %v2116, %v2112
    %v2373 = vpack.c.b16 %v2117, %v2113
    %2630 = vmatprep.subr.bf16.mxu0 %v2119
    %2631 = vmatpush1.bf16.msra.mxu0 %v2118
    %2632 = vmatprep.subr.bf16.mxu0 %v2123
    %2633 = vmatpush1.bf16.msra.mxu0 %v2122
    %2634 = vmatprep.subr.bf16.mxu0 %v2127
    %2635 = vmatpush1.bf16.msra.mxu0 %v2126
    %2636 = vmatprep.subr.bf16.mxu0 %v2131
    %2637 = vmatpush1.bf16.msra.mxu0 %v2130
    %2638 = vmatprep.subr.bf16.mxu0 %v2135
    %2639 = vmatpush1.bf16.msra.mxu0 %v2134
    %2640 = vmatprep.subr.bf16.mxu0 %v2139
    %2641 = vmatpush1.bf16.msra.mxu0 %v2138
    %2642 = vmatprep.subr.bf16.mxu0 %v2143
    %2643 = vmatpush1.bf16.msra.mxu0 %v2142
    %2644 = vmatprep.subr.bf16.mxu0 %v2147
    %2645 = vmatpush1.bf16.msra.mxu0 %v2146
    %2646 = vmatprep.subr.bf16.mxu0 %v2151
    %2647 = vmatpush1.bf16.msra.mxu0 %v2150
    %2648 = vmatprep.subr.bf16.mxu0 %v2155
    %2649 = vmatpush1.bf16.msra.mxu0 %v2154
    %2650 = vmatprep.subr.bf16.mxu0 %v2159
    %2651 = vmatpush1.bf16.msra.mxu0 %v2158
    %2652 = vmatprep.subr.bf16.mxu0 %v2163
    %2653 = vmatpush1.bf16.msra.mxu0 %v2162
    %2654 = vmatprep.subr.bf16.mxu0 %v2167
    %2655 = vmatpush1.bf16.msra.mxu0 %v2166
    %2656 = vmatprep.subr.bf16.mxu0 %v2171
    %2657 = vmatpush1.bf16.msra.mxu0 %v2170
    %2658 = vmatprep.subr.bf16.mxu0 %v2175
    %2659 = vmatpush1.bf16.msra.mxu0 %v2174
    %2660 = vmatprep.subr.bf16.mxu0 %v2179
    %2661 = vmatpush1.bf16.msra.mxu0 %v2178
    %2662 = vmatprep.mubr.bf16.mxu0 %v1065
    %2663 = vmatmul.mubr.bf16.gmra.mrb[0].mxu0 %v1064
    %v2664 = vpop.f32.mrb[0].mxu0
    %v2665 = vadd.f32 %v1333, %v2664
    %v2666 = vpop.f32.mrb[0].mxu0
    %v2667 = vadd.f32 %v1337, %v2666
    %v2668 = vpop.f32.mrb[0].mxu0
    %v2669 = vpop.f32.mrb[0].mxu0
    %2670 = vdwg.mxu0
    %2671 = vmatprep.subr.bf16.mxu0 %v2183
    %2672 = vmatpush1.bf16.msra.mxu0 %v2182
    %2673 = vmatprep.subr.bf16.mxu0 %v2187
    %2674 = vmatpush1.bf16.msra.mxu0 %v2186
    %2675 = vmatprep.subr.bf16.mxu0 %v2191
    %2676 = vmatpush1.bf16.msra.mxu0 %v2190
    %2677 = vmatprep.subr.bf16.mxu0 %v2195
    %2678 = vmatpush1.bf16.msra.mxu0 %v2194
    %2679 = vmatprep.subr.bf16.mxu0 %v2199
    %2680 = vmatpush1.bf16.msra.mxu0 %v2198
    %2681 = vmatprep.subr.bf16.mxu0 %v2203
    %2682 = vmatpush1.bf16.msra.mxu0 %v2202
    %2683 = vmatprep.subr.bf16.mxu0 %v2207
    %2684 = vmatpush1.bf16.msra.mxu0 %v2206
    %2685 = vmatprep.subr.bf16.mxu0 %v2211
    %2686 = vmatpush1.bf16.msra.mxu0 %v2210
    %2687 = vmatprep.subr.bf16.mxu0 %v2215
    %2688 = vmatpush1.bf16.msra.mxu0 %v2214
    %2689 = vmatprep.subr.bf16.mxu0 %v2219
    %2690 = vmatpush1.bf16.msra.mxu0 %v2218
    %2691 = vmatprep.subr.bf16.mxu0 %v2223
    %2692 = vmatpush1.bf16.msra.mxu0 %v2222
    %2693 = vmatprep.subr.bf16.mxu0 %v2227
    %2694 = vmatpush1.bf16.msra.mxu0 %v2226
    %2695 = vmatprep.subr.bf16.mxu0 %v2231
    %2696 = vmatpush1.bf16.msra.mxu0 %v2230
    %2697 = vmatprep.subr.bf16.mxu0 %v2235
    %2698 = vmatpush1.bf16.msra.mxu0 %v2234
    %2699 = vmatprep.subr.bf16.mxu0 %v2239
    %2700 = vmatpush1.bf16.msra.mxu0 %v2238
    %2701 = vmatprep.subr.bf16.mxu0 %v2243
    %2702 = vmatpush1.bf16.msra.mxu0 %v2242
    %2703 = vmatprep.mubr.bf16.mxu0 %v1067
    %2704 = vmatmul.mubr.bf16.gmra.mrb[0].mxu0 %v1066
    %v2705 = vpop.f32.mrb[0].mxu0
    %v2706 = vadd.f32 %v2665, %v2705
    %v2707 = vpop.f32.mrb[0].mxu0
    %v2708 = vadd.f32 %v2667, %v2707
    %v2709 = vpop.f32.mrb[0].mxu0
    %v2710 = vpop.f32.mrb[0].mxu0
    %2711 = vdwg.mxu0
    %2712 = vmatprep.subr.bf16.mxu0 %v2247
    %2713 = vmatpush1.bf16.msra.mxu0 %v2246
    %2714 = vmatprep.subr.bf16.mxu0 %v2251
    %2715 = vmatpush1.bf16.msra.mxu0 %v2250
    %2716 = vmatprep.subr.bf16.mxu0 %v2255
    %2717 = vmatpush1.bf16.msra.mxu0 %v2254
    %2718 = vmatprep.subr.bf16.mxu0 %v2259
    %2719 = vmatpush1.bf16.msra.mxu0 %v2258
    %2720 = vmatprep.subr.bf16.mxu0 %v2263
    %2721 = vmatpush1.bf16.msra.mxu0 %v2262
    %2722 = vmatprep.subr.bf16.mxu0 %v2267
    %2723 = vmatpush1.bf16.msra.mxu0 %v2266
    %2724 = vmatprep.subr.bf16.mxu0 %v2271
    %2725 = vmatpush1.bf16.msra.mxu0 %v2270
    %2726 = vmatprep.subr.bf16.mxu0 %v2275
    %2727 = vmatpush1.bf16.msra.mxu0 %v2274
    %2728 = vmatprep.subr.bf16.mxu0 %v2279
    %2729 = vmatpush1.bf16.msra.mxu0 %v2278
    %2730 = vmatprep.subr.bf16.mxu0 %v2283
    %2731 = vmatpush1.bf16.msra.mxu0 %v2282
    %2732 = vmatprep.subr.bf16.mxu0 %v2287
    %2733 = vmatpush1.bf16.msra.mxu0 %v2286
    %2734 = vmatprep.subr.bf16.mxu0 %v2291
    %2735 = vmatpush1.bf16.msra.mxu0 %v2290
    %2736 = vmatprep.subr.bf16.mxu0 %v2295
    %2737 = vmatpush1.bf16.msra.mxu0 %v2294
    %2738 = vmatprep.subr.bf16.mxu0 %v2299
    %2739 = vmatpush1.bf16.msra.mxu0 %v2298
    %2740 = vmatprep.subr.bf16.mxu0 %v2303
    %2741 = vmatpush1.bf16.msra.mxu0 %v2302
    %2742 = vmatprep.subr.bf16.mxu0 %v2307
    %2743 = vmatpush1.bf16.msra.mxu0 %v2306
    %2744 = vmatprep.mubr.bf16.mxu0 %v1069
    %2745 = vmatmul.mubr.bf16.gmra.mrb[0].mxu0 %v1068
    %v2746 = vpop.f32.mrb[0].mxu0
    %v2747 = vadd.f32 %v2706, %v2746
    %v2748 = vpop.f32.mrb[0].mxu0
    %v2749 = vadd.f32 %v2708, %v2748
    %v2750 = vpop.f32.mrb[0].mxu0
    %v2751 = vpop.f32.mrb[0].mxu0
    %2752 = vdwg.mxu0
    %2753 = vmatprep.subr.bf16.mxu0 %v2311
    %2754 = vmatpush1.bf16.msra.mxu0 %v2310
    %2755 = vmatprep.subr.bf16.mxu0 %v2315
    %2756 = vmatpush1.bf16.msra.mxu0 %v2314
    %2757 = vmatprep.subr.bf16.mxu0 %v2319
    %2758 = vmatpush1.bf16.msra.mxu0 %v2318
    %2759 = vmatprep.subr.bf16.mxu0 %v2323
    %2760 = vmatpush1.bf16.msra.mxu0 %v2322
    %2761 = vmatprep.subr.bf16.mxu0 %v2327
    %2762 = vmatpush1.bf16.msra.mxu0 %v2326
    %2763 = vmatprep.subr.bf16.mxu0 %v2331
    %2764 = vmatpush1.bf16.msra.mxu0 %v2330
    %2765 = vmatprep.subr.bf16.mxu0 %v2335
    %2766 = vmatpush1.bf16.msra.mxu0 %v2334
    %2767 = vmatprep.subr.bf16.mxu0 %v2339
    %2768 = vmatpush1.bf16.msra.mxu0 %v2338
    %2769 = vmatprep.subr.bf16.mxu0 %v2343
    %2770 = vmatpush1.bf16.msra.mxu0 %v2342
    %2771 = vmatprep.subr.bf16.mxu0 %v2347
    %2772 = vmatpush1.bf16.msra.mxu0 %v2346
    %2773 = vmatprep.subr.bf16.mxu0 %v2351
    %2774 = vmatpush1.bf16.msra.mxu0 %v2350
    %2775 = vmatprep.subr.bf16.mxu0 %v2355
    %2776 = vmatpush1.bf16.msra.mxu0 %v2354
    %2777 = vmatprep.subr.bf16.mxu0 %v2359
    %2778 = vmatpush1.bf16.msra.mxu0 %v2358
    %2779 = vmatprep.subr.bf16.mxu0 %v2363
    %2780 = vmatpush1.bf16.msra.mxu0 %v2362
    %2781 = vmatprep.subr.bf16.mxu0 %v2367
    %2782 = vmatpush1.bf16.msra.mxu0 %v2366
    %2783 = vmatprep.subr.bf16.mxu0 %v2371
    %2784 = vmatpush1.bf16.msra.mxu0 %v2370
    %2785 = vmatprep.mubr.bf16.mxu0 %v1071
    %2786 = vmatmul.mubr.bf16.gmra.mrb[0].mxu0 %v1070
    %v2787 = vpop.f32.mrb[0].mxu0
    %v2788 = vadd.f32 %v2747, %v2787
    %v2789 = vpop.f32.mrb[0].mxu0
    %v2790 = vadd.f32 %v2749, %v2789
    %v2791 = vpop.f32.mrb[0].mxu0
    %v2792 = vpop.f32.mrb[0].mxu0
    %2793 = vdwg.mxu0
    %2794 = vmatprep.subr.bf16.mxu0 %v2121
    %2795 = vmatpush1.bf16.msra.mxu0 %v2120
    %2796 = vmatprep.subr.bf16.mxu0 %v2125
    %2797 = vmatpush1.bf16.msra.mxu0 %v2124
    %2798 = vmatprep.subr.bf16.mxu0 %v2129
    %2799 = vmatpush1.bf16.msra.mxu0 %v2128
    %2800 = vmatprep.subr.bf16.mxu0 %v2133
    %2801 = vmatpush1.bf16.msra.mxu0 %v2132
    %2802 = vmatprep.subr.bf16.mxu0 %v2137
    %2803 = vmatpush1.bf16.msra.mxu0 %v2136
    %2804 = vmatprep.subr.bf16.mxu0 %v2141
    %2805 = vmatpush1.bf16.msra.mxu0 %v2140
    %2806 = vmatprep.subr.bf16.mxu0 %v2145
    %2807 = vmatpush1.bf16.msra.mxu0 %v2144
    %2808 = vmatprep.subr.bf16.mxu0 %v2149
    %2809 = vmatpush1.bf16.msra.mxu0 %v2148
    %2810 = vmatprep.subr.bf16.mxu0 %v2153
    %2811 = vmatpush1.bf16.msra.mxu0 %v2152
    %2812 = vmatprep.subr.bf16.mxu0 %v2157
    %2813 = vmatpush1.bf16.msra.mxu0 %v2156
    %2814 = vmatprep.subr.bf16.mxu0 %v2161
    %2815 = vmatpush1.bf16.msra.mxu0 %v2160
    %2816 = vmatprep.subr.bf16.mxu0 %v2165
    %2817 = vmatpush1.bf16.msra.mxu0 %v2164
    %2818 = vmatprep.subr.bf16.mxu0 %v2169
    %2819 = vmatpush1.bf16.msra.mxu0 %v2168
    %2820 = vmatprep.subr.bf16.mxu0 %v2173
    %2821 = vmatpush1.bf16.msra.mxu0 %v2172
    %2822 = vmatprep.subr.bf16.mxu0 %v2177
    %2823 = vmatpush1.bf16.msra.mxu0 %v2176
    %2824 = vmatprep.subr.bf16.mxu0 %v2181
    %2825 = vmatpush1.bf16.msra.mxu0 %v2180
    %2826 = vmatprep.mubr.bf16.mxu0 %v1065
    %2827 = vmatmul.mubr.bf16.gmra.mrb[0].mxu0 %v1064
    %v2828 = vpop.f32.mrb[0].mxu0
    %v2829 = vadd.f32 %v1341, %v2828
    %v2830 = vpop.f32.mrb[0].mxu0
    %v2831 = vadd.f32 %v1345, %v2830
    %v2832 = vpop.f32.mrb[0].mxu0
    %v2833 = vpop.f32.mrb[0].mxu0
    %2834 = vdwg.mxu0
    %2835 = vmatprep.subr.bf16.mxu0 %v2185
    %2836 = vmatpush1.bf16.msra.mxu0 %v2184
    %2837 = vmatprep.subr.bf16.mxu0 %v2189
    %2838 = vmatpush1.bf16.msra.mxu0 %v2188
    %2839 = vmatprep.subr.bf16.mxu0 %v2193
    %2840 = vmatpush1.bf16.msra.mxu0 %v2192
    %2841 = vmatprep.subr.bf16.mxu0 %v2197
    %2842 = vmatpush1.bf16.msra.mxu0 %v2196
    %2843 = vmatprep.subr.bf16.mxu0 %v2201
    %2844 = vmatpush1.bf16.msra.mxu0 %v2200
    %2845 = vmatprep.subr.bf16.mxu0 %v2205
    %2846 = vmatpush1.bf16.msra.mxu0 %v2204
    %2847 = vmatprep.subr.bf16.mxu0 %v2209
    %2848 = vmatpush1.bf16.msra.mxu0 %v2208
    %2849 = vmatprep.subr.bf16.mxu0 %v2213
    %2850 = vmatpush1.bf16.msra.mxu0 %v2212
    %2851 = vmatprep.subr.bf16.mxu0 %v2217
    %2852 = vmatpush1.bf16.msra.mxu0 %v2216
    %2853 = vmatprep.subr.bf16.mxu0 %v2221
    %2854 = vmatpush1.bf16.msra.mxu0 %v2220
    %2855 = vmatprep.subr.bf16.mxu0 %v2225
    %2856 = vmatpush1.bf16.msra.mxu0 %v2224
    %2857 = vmatprep.subr.bf16.mxu0 %v2229
    %2858 = vmatpush1.bf16.msra.mxu0 %v2228
    %2859 = vmatprep.subr.bf16.mxu0 %v2233
    %2860 = vmatpush1.bf16.msra.mxu0 %v2232
    %2861 = vmatprep.subr.bf16.mxu0 %v2237
    %2862 = vmatpush1.bf16.msra.mxu0 %v2236
    %2863 = vmatprep.subr.bf16.mxu0 %v2241
    %2864 = vmatpush1.bf16.msra.mxu0 %v2240
    %2865 = vmatprep.subr.bf16.mxu0 %v2245
    %2866 = vmatpush1.bf16.msra.mxu0 %v2244
    %2867 = vmatprep.mubr.bf16.mxu0 %v1067
    %2868 = vmatmul.mubr.bf16.gmra.mrb[0].mxu0 %v1066
    %v2869 = vpop.f32.mrb[0].mxu0
    %v2870 = vadd.f32 %v2829, %v2869
    %v2871 = vpop.f32.mrb[0].mxu0
    %v2872 = vadd.f32 %v2831, %v2871
    %v2873 = vpop.f32.mrb[0].mxu0
    %v2874 = vpop.f32.mrb[0].mxu0
    %2875 = vdwg.mxu0
    %2876 = vmatprep.subr.bf16.mxu0 %v2249
    %2877 = vmatpush1.bf16.msra.mxu0 %v2248
    %2878 = vmatprep.subr.bf16.mxu0 %v2253
    %2879 = vmatpush1.bf16.msra.mxu0 %v2252
    %2880 = vmatprep.subr.bf16.mxu0 %v2257
    %2881 = vmatpush1.bf16.msra.mxu0 %v2256
    %2882 = vmatprep.subr.bf16.mxu0 %v2261
    %2883 = vmatpush1.bf16.msra.mxu0 %v2260
    %2884 = vmatprep.subr.bf16.mxu0 %v2265
    %2885 = vmatpush1.bf16.msra.mxu0 %v2264
    %2886 = vmatprep.subr.bf16.mxu0 %v2269
    %2887 = vmatpush1.bf16.msra.mxu0 %v2268
    %2888 = vmatprep.subr.bf16.mxu0 %v2273
    %2889 = vmatpush1.bf16.msra.mxu0 %v2272
    %2890 = vmatprep.subr.bf16.mxu0 %v2277
    %2891 = vmatpush1.bf16.msra.mxu0 %v2276
    %2892 = vmatprep.subr.bf16.mxu0 %v2281
    %2893 = vmatpush1.bf16.msra.mxu0 %v2280
    %2894 = vmatprep.subr.bf16.mxu0 %v2285
    %2895 = vmatpush1.bf16.msra.mxu0 %v2284
    %2896 = vmatprep.subr.bf16.mxu0 %v2289
    %2897 = vmatpush1.bf16.msra.mxu0 %v2288
    %2898 = vmatprep.subr.bf16.mxu0 %v2293
    %2899 = vmatpush1.bf16.msra.mxu0 %v2292
    %2900 = vmatprep.subr.bf16.mxu0 %v2297
    %2901 = vmatpush1.bf16.msra.mxu0 %v2296
    %2902 = vmatprep.subr.bf16.mxu0 %v2301
    %2903 = vmatpush1.bf16.msra.mxu0 %v2300
    %2904 = vmatprep.subr.bf16.mxu0 %v2305
    %2905 = vmatpush1.bf16.msra.mxu0 %v2304
    %2906 = vmatprep.subr.bf16.mxu0 %v2309
    %2907 = vmatpush1.bf16.msra.mxu0 %v2308
    %2908 = vmatprep.mubr.bf16.mxu0 %v1069
    %2909 = vmatmul.mubr.bf16.gmra.mrb[0].mxu0 %v1068
    %v2910 = vpop.f32.mrb[0].mxu0
    %v2911 = vadd.f32 %v2870, %v2910
    %v2912 = vpop.f32.mrb[0].mxu0
    %v2913 = vadd.f32 %v2872, %v2912
    %v2914 = vpop.f32.mrb[0].mxu0
    %v2915 = vpop.f32.mrb[0].mxu0
    %2916 = vdwg.mxu0
    %2917 = vmatprep.subr.bf16.mxu0 %v2313
    %2918 = vmatpush1.bf16.msra.mxu0 %v2312
    %2919 = vmatprep.subr.bf16.mxu0 %v2317
    %2920 = vmatpush1.bf16.msra.mxu0 %v2316
    %2921 = vmatprep.subr.bf16.mxu0 %v2321
    %2922 = vmatpush1.bf16.msra.mxu0 %v2320
    %2923 = vmatprep.subr.bf16.mxu0 %v2325
    %2924 = vmatpush1.bf16.msra.mxu0 %v2324
    %2925 = vmatprep.subr.bf16.mxu0 %v2329
    %2926 = vmatpush1.bf16.msra.mxu0 %v2328
    %2927 = vmatprep.subr.bf16.mxu0 %v2333
    %2928 = vmatpush1.bf16.msra.mxu0 %v2332
    %2929 = vmatprep.subr.bf16.mxu0 %v2337
    %2930 = vmatpush1.bf16.msra.mxu0 %v2336
    %2931 = vmatprep.subr.bf16.mxu0 %v2341
    %2932 = vmatpush1.bf16.msra.mxu0 %v2340
    %2933 = vmatprep.subr.bf16.mxu0 %v2345
    %2934 = vmatpush1.bf16.msra.mxu0 %v2344
    %2935 = vmatprep.subr.bf16.mxu0 %v2349
    %2936 = vmatpush1.bf16.msra.mxu0 %v2348
    %2937 = vmatprep.subr.bf16.mxu0 %v2353
    %2938 = vmatpush1.bf16.msra.mxu0 %v2352
    %2939 = vmatprep.subr.bf16.mxu0 %v2357
    %2940 = vmatpush1.bf16.msra.mxu0 %v2356
    %2941 = vmatprep.subr.bf16.mxu0 %v2361
    %2942 = vmatpush1.bf16.msra.mxu0 %v2360
    %2943 = vmatprep.subr.bf16.mxu0 %v2365
    %2944 = vmatpush1.bf16.msra.mxu0 %v2364
    %2945 = vmatprep.subr.bf16.mxu0 %v2369
    %2946 = vmatpush1.bf16.msra.mxu0 %v2368
    %2947 = vmatprep.subr.bf16.mxu0 %v2373
    %2948 = vmatpush1.bf16.msra.mxu0 %v2372
    %2949 = vmatprep.mubr.bf16.mxu0 %v1071
    %2950 = vmatmul.mubr.bf16.gmra.mrb[0].mxu0 %v1070
    %v2951 = vpop.f32.mrb[0].mxu0
    %v2952 = vadd.f32 %v2911, %v2951
    %v2953 = vpop.f32.mrb[0].mxu0
    %v2954 = vadd.f32 %v2913, %v2953
    %v2955 = vpop.f32.mrb[0].mxu0
    %v2956 = vpop.f32.mrb[0].mxu0
    %2957 = vdwg.mxu0
    %v2958 = vmax.f32 %v2788, 0.0
    %v2959 = vmax.f32 %v2790, 0.0
    %v2960 = vmax.f32 %v2952, 0.0
    %v2961 = vmax.f32 %v2954, 0.0
    %v2962 = vpack.c.bf16 %v2958, %v2958
    %v2963 = vpack.c.bf16 %v2959, %v2959
    %v2964 = vpack.c.bf16 %v2960, %v2960
    %v2965 = vpack.c.bf16 %v2961, %v2961
    %v2966 = vld [vmem:[#allocation6] sm:$0xf]
    %v2967 = vld [vmem:[#allocation6 + $0x4] sm:$0xf]
    %v2968 = vld [vmem:[#allocation6 + $0x8] sm:$0xf]
    %v2969 = vld [vmem:[#allocation6 + $0xc] sm:$0xf]
    %v2970 = vld [vmem:[#allocation6 + $0x10] sm:$0xf]
    %v2971 = vld [vmem:[#allocation6 + $0x14] sm:$0xf]
    %v2972 = vld [vmem:[#allocation6 + $0x18] sm:$0xf]
    %v2973 = vld [vmem:[#allocation6 + $0x1c] sm:$0xf]
    %v2974 = vld [vmem:[#allocation6 + $0x20] sm:$0xf]
    %v2975 = vld [vmem:[#allocation6 + $0x24] sm:$0xf]
    %v2976 = vld [vmem:[#allocation6 + $0x28] sm:$0xf]
    %v2977 = vld [vmem:[#allocation6 + $0x2c] sm:$0xf]
    %v2978 = vld [vmem:[#allocation6 + $0x30] sm:$0xf]
    %v2979 = vld [vmem:[#allocation6 + $0x34] sm:$0xf]
    %v2980 = vld [vmem:[#allocation6 + $0x38] sm:$0xf]
    %v2981 = vld [vmem:[#allocation6 + $0x3c] sm:$0xf]
    %v2982 = vld [vmem:[#allocation6 + $0x40] sm:$0xf]
    %v2983 = vld [vmem:[#allocation6 + $0x44] sm:$0xf]
    %v2984 = vld [vmem:[#allocation6 + $0x48] sm:$0xf]
    %v2985 = vld [vmem:[#allocation6 + $0x4c] sm:$0xf]
    %v2986 = vld [vmem:[#allocation6 + $0x50] sm:$0xf]
    %v2987 = vld [vmem:[#allocation6 + $0x54] sm:$0xf]
    %v2988 = vld [vmem:[#allocation6 + $0x58] sm:$0xf]
    %v2989 = vld [vmem:[#allocation6 + $0x5c] sm:$0xf]
    %v2990 = vld [vmem:[#allocation6 + $0x60] sm:$0xf]
    %v2991 = vld [vmem:[#allocation6 + $0x64] sm:$0xf]
    %v2992 = vld [vmem:[#allocation6 + $0x68] sm:$0xf]
    %v2993 = vld [vmem:[#allocation6 + $0x6c] sm:$0xf]
    %v2994 = vld [vmem:[#allocation6 + $0x70] sm:$0xf]
    %v2995 = vld [vmem:[#allocation6 + $0x74] sm:$0xf]
    %v2996 = vld [vmem:[#allocation6 + $0x78] sm:$0xf]
    %v2997 = vld [vmem:[#allocation6 + $0x7c] sm:$0xf]
    %v2998 = vld [vmem:[#allocation6 + $0x80] sm:$0xf]
    %v2999 = vld [vmem:[#allocation6 + $0x84] sm:$0xf]
    %v3000 = vld [vmem:[#allocation6 + $0x88] sm:$0xf]
    %v3001 = vld [vmem:[#allocation6 + $0x8c] sm:$0xf]
    %v3002 = vld [vmem:[#allocation6 + $0x90] sm:$0xf]
    %v3003 = vld [vmem:[#allocation6 + $0x94] sm:$0xf]
    %v3004 = vld [vmem:[#allocation6 + $0x98] sm:$0xf]
    %v3005 = vld [vmem:[#allocation6 + $0x9c] sm:$0xf]
    %v3006 = vld [vmem:[#allocation6 + $0xa0] sm:$0xf]
    %v3007 = vld [vmem:[#allocation6 + $0xa4] sm:$0xf]
    %v3008 = vld [vmem:[#allocation6 + $0xa8] sm:$0xf]
    %v3009 = vld [vmem:[#allocation6 + $0xac] sm:$0xf]
    %v3010 = vld [vmem:[#allocation6 + $0xb0] sm:$0xf]
    %v3011 = vld [vmem:[#allocation6 + $0xb4] sm:$0xf]
    %v3012 = vld [vmem:[#allocation6 + $0xb8] sm:$0xf]
    %v3013 = vld [vmem:[#allocation6 + $0xbc] sm:$0xf]
    %v3014 = vld [vmem:[#allocation6 + $0xc0] sm:$0xf]
    %v3015 = vld [vmem:[#allocation6 + $0xc4] sm:$0xf]
    %v3016 = vld [vmem:[#allocation6 + $0xc8] sm:$0xf]
    %v3017 = vld [vmem:[#allocation6 + $0xcc] sm:$0xf]
    %v3018 = vld [vmem:[#allocation6 + $0xd0] sm:$0xf]
    %v3019 = vld [vmem:[#allocation6 + $0xd4] sm:$0xf]
    %v3020 = vld [vmem:[#allocation6 + $0xd8] sm:$0xf]
    %v3021 = vld [vmem:[#allocation6 + $0xdc] sm:$0xf]
    %v3022 = vld [vmem:[#allocation6 + $0xe0] sm:$0xf]
    %v3023 = vld [vmem:[#allocation6 + $0xe4] sm:$0xf]
    %v3024 = vld [vmem:[#allocation6 + $0xe8] sm:$0xf]
    %v3025 = vld [vmem:[#allocation6 + $0xec] sm:$0xf]
    %v3026 = vld [vmem:[#allocation6 + $0xf0] sm:$0xf]
    %v3027 = vld [vmem:[#allocation6 + $0xf4] sm:$0xf]
    %v3028 = vld [vmem:[#allocation6 + $0xf8] sm:$0xf]
    %v3029 = vld [vmem:[#allocation6 + $0xfc] sm:$0xf]
    %v3030 = vld [vmem:[%s6] sm:$0x1]
    %v3032 = vlaneseq
    %v3033 = vshrl.u32 %v3032, 7
    %v3034 = vsub.s32 0, %v3033
    %v3035 = vrot.slane %v3030, %v3034
    %v3101 = vunpack.c.l.b16 %v2966
    %v3102 = vunpack.c.l.b16 %v2967
    %v3103 = vunpack.c.l.b16 %v2968
    %v3104 = vunpack.c.l.b16 %v2969
    %v3105 = vunpack.c.l.b16 %v2970
    %v3106 = vunpack.c.l.b16 %v2971
    %v3107 = vunpack.c.l.b16 %v2972
    %v3108 = vunpack.c.l.b16 %v2973
    %v3109 = vunpack.c.l.b16 %v2974
    %v3110 = vunpack.c.l.b16 %v2975
    %v3111 = vunpack.c.l.b16 %v2976
    %v3112 = vunpack.c.l.b16 %v2977
    %v3113 = vunpack.c.l.b16 %v2978
    %v3114 = vunpack.c.l.b16 %v2979
    %v3115 = vunpack.c.l.b16 %v2980
    %v3116 = vunpack.c.l.b16 %v2981
    %v3117 = vunpack.c.l.b16 %v2982
    %v3118 = vunpack.c.l.b16 %v2983
    %v3119 = vunpack.c.l.b16 %v2984
    %v3120 = vunpack.c.l.b16 %v2985
    %v3121 = vunpack.c.l.b16 %v2986
    %v3122 = vunpack.c.l.b16 %v2987
    %v3123 = vunpack.c.l.b16 %v2988
    %v3124 = vunpack.c.l.b16 %v2989
    %v3125 = vunpack.c.l.b16 %v2990
    %v3126 = vunpack.c.l.b16 %v2991
    %v3127 = vunpack.c.l.b16 %v2992
    %v3128 = vunpack.c.l.b16 %v2993
    %v3129 = vunpack.c.l.b16 %v2994
    %v3130 = vunpack.c.l.b16 %v2995
    %v3131 = vunpack.c.l.b16 %v2996
    %v3132 = vunpack.c.l.b16 %v2997
    %v3133 = vunpack.c.l.b16 %v2998
    %v3134 = vunpack.c.l.b16 %v2999
    %v3135 = vunpack.c.l.b16 %v3000
    %v3136 = vunpack.c.l.b16 %v3001
    %v3137 = vunpack.c.l.b16 %v3002
    %v3138 = vunpack.c.l.b16 %v3003
    %v3139 = vunpack.c.l.b16 %v3004
    %v3140 = vunpack.c.l.b16 %v3005
    %v3141 = vunpack.c.l.b16 %v3006
    %v3142 = vunpack.c.l.b16 %v3007
    %v3143 = vunpack.c.l.b16 %v3008
    %v3144 = vunpack.c.l.b16 %v3009
    %v3145 = vunpack.c.l.b16 %v3010
    %v3146 = vunpack.c.l.b16 %v3011
    %v3147 = vunpack.c.l.b16 %v3012
    %v3148 = vunpack.c.l.b16 %v3013
    %v3149 = vunpack.c.l.b16 %v3014
    %v3150 = vunpack.c.l.b16 %v3015
    %v3151 = vunpack.c.l.b16 %v3016
    %v3152 = vunpack.c.l.b16 %v3017
    %v3153 = vunpack.c.l.b16 %v3018
    %v3154 = vunpack.c.l.b16 %v3019
    %v3155 = vunpack.c.l.b16 %v3020
    %v3156 = vunpack.c.l.b16 %v3021
    %v3157 = vunpack.c.l.b16 %v3022
    %v3158 = vunpack.c.l.b16 %v3023
    %v3159 = vunpack.c.l.b16 %v3024
    %v3160 = vunpack.c.l.b16 %v3025
    %v3161 = vunpack.c.l.b16 %v3026
    %v3162 = vunpack.c.l.b16 %v3027
    %v3163 = vunpack.c.l.b16 %v3028
    %v3164 = vunpack.c.l.b16 %v3029
    %v3165 = vpack.c.b16 %v3102, %v3101
    %v3166 = vpack.c.b16 %v3104, %v3103
    %v3167 = vpack.c.b16 %v3106, %v3105
    %v3168 = vpack.c.b16 %v3108, %v3107
    %v3169 = vpack.c.b16 %v3110, %v3109
    %v3170 = vpack.c.b16 %v3112, %v3111
    %v3171 = vpack.c.b16 %v3114, %v3113
    %v3172 = vpack.c.b16 %v3116, %v3115
    %v3173 = vpack.c.b16 %v3118, %v3117
    %v3174 = vpack.c.b16 %v3120, %v3119
    %v3175 = vpack.c.b16 %v3122, %v3121
    %v3176 = vpack.c.b16 %v3124, %v3123
    %v3177 = vpack.c.b16 %v3126, %v3125
    %v3178 = vpack.c.b16 %v3128, %v3127
    %v3179 = vpack.c.b16 %v3130, %v3129
    %v3180 = vpack.c.b16 %v3132, %v3131
    %v3181 = vpack.c.b16 %v3134, %v3133
    %v3182 = vpack.c.b16 %v3136, %v3135
    %v3183 = vpack.c.b16 %v3138, %v3137
    %v3184 = vpack.c.b16 %v3140, %v3139
    %v3185 = vpack.c.b16 %v3142, %v3141
    %v3186 = vpack.c.b16 %v3144, %v3143
    %v3187 = vpack.c.b16 %v3146, %v3145
    %v3188 = vpack.c.b16 %v3148, %v3147
    %v3189 = vpack.c.b16 %v3150, %v3149
    %v3190 = vpack.c.b16 %v3152, %v3151
    %v3191 = vpack.c.b16 %v3154, %v3153
    %v3192 = vpack.c.b16 %v3156, %v3155
    %v3193 = vpack.c.b16 %v3158, %v3157
    %v3194 = vpack.c.b16 %v3160, %v3159
    %v3195 = vpack.c.b16 %v3162, %v3161
    %v3196 = vpack.c.b16 %v3164, %v3163
    %3229 = vmatprep.subr.bf16.mxu0 0
    %3230 = vmatpush1.bf16.msra.mxu0 %v3165
    %3231 = vmatprep.subr.bf16.mxu0 0
    %3232 = vmatpush1.bf16.msra.mxu0 %v3166
    %3233 = vmatprep.subr.bf16.mxu0 0
    %3234 = vmatpush1.bf16.msra.mxu0 %v3167
    %3235 = vmatprep.subr.bf16.mxu0 0
    %3236 = vmatpush1.bf16.msra.mxu0 %v3168
    %3237 = vmatprep.subr.bf16.mxu0 0
    %3238 = vmatpush1.bf16.msra.mxu0 %v3169
    %3239 = vmatprep.subr.bf16.mxu0 0
    %3240 = vmatpush1.bf16.msra.mxu0 %v3170
    %3241 = vmatprep.subr.bf16.mxu0 0
    %3242 = vmatpush1.bf16.msra.mxu0 %v3171
    %3243 = vmatprep.subr.bf16.mxu0 0
    %3244 = vmatpush1.bf16.msra.mxu0 %v3172
    %3245 = vmatprep.subr.bf16.mxu0 0
    %3246 = vmatpush1.bf16.msra.mxu0 %v3173
    %3247 = vmatprep.subr.bf16.mxu0 0
    %3248 = vmatpush1.bf16.msra.mxu0 %v3174
    %3249 = vmatprep.subr.bf16.mxu0 0
    %3250 = vmatpush1.bf16.msra.mxu0 %v3175
    %3251 = vmatprep.subr.bf16.mxu0 0
    %3252 = vmatpush1.bf16.msra.mxu0 %v3176
    %3253 = vmatprep.subr.bf16.mxu0 0
    %3254 = vmatpush1.bf16.msra.mxu0 %v3177
    %3255 = vmatprep.subr.bf16.mxu0 0
    %3256 = vmatpush1.bf16.msra.mxu0 %v3178
    %3257 = vmatprep.subr.bf16.mxu0 0
    %3258 = vmatpush1.bf16.msra.mxu0 %v3179
    %3259 = vmatprep.subr.bf16.mxu0 0
    %3260 = vmatpush1.bf16.msra.mxu0 %v3180
    %3261 = vmatprep.mubr.bf16.mxu0 %v2963
    %3262 = vmatmul.mubr.bf16.gmra.mrb[0].mxu0 %v2962
    %v3263 = vpop.f32.mrb[0].mxu0
    %v3264 = vadd.f32 %v3035, %v3263
    %v3265 = vpop.f32.mrb[0].mxu0
    %v3266 = vpop.f32.mrb[0].mxu0
    %v3267 = vpop.f32.mrb[0].mxu0
    %3268 = vdwg.mxu0
    %3269 = vmatprep.subr.bf16.mxu0 0
    %3270 = vmatpush1.bf16.msra.mxu0 %v3181
    %3271 = vmatprep.subr.bf16.mxu0 0
    %3272 = vmatpush1.bf16.msra.mxu0 %v3182
    %3273 = vmatprep.subr.bf16.mxu0 0
    %3274 = vmatpush1.bf16.msra.mxu0 %v3183
    %3275 = vmatprep.subr.bf16.mxu0 0
    %3276 = vmatpush1.bf16.msra.mxu0 %v3184
    %3277 = vmatprep.subr.bf16.mxu0 0
    %3278 = vmatpush1.bf16.msra.mxu0 %v3185
    %3279 = vmatprep.subr.bf16.mxu0 0
    %3280 = vmatpush1.bf16.msra.mxu0 %v3186
    %3281 = vmatprep.subr.bf16.mxu0 0
    %3282 = vmatpush1.bf16.msra.mxu0 %v3187
    %3283 = vmatprep.subr.bf16.mxu0 0
    %3284 = vmatpush1.bf16.msra.mxu0 %v3188
    %3285 = vmatprep.subr.bf16.mxu0 0
    %3286 = vmatpush1.bf16.msra.mxu0 %v3189
    %3287 = vmatprep.subr.bf16.mxu0 0
    %3288 = vmatpush1.bf16.msra.mxu0 %v3190
    %3289 = vmatprep.subr.bf16.mxu0 0
    %3290 = vmatpush1.bf16.msra.mxu0 %v3191
    %3291 = vmatprep.subr.bf16.mxu0 0
    %3292 = vmatpush1.bf16.msra.mxu0 %v3192
    %3293 = vmatprep.subr.bf16.mxu0 0
    %3294 = vmatpush1.bf16.msra.mxu0 %v3193
    %3295 = vmatprep.subr.bf16.mxu0 0
    %3296 = vmatpush1.bf16.msra.mxu0 %v3194
    %3297 = vmatprep.subr.bf16.mxu0 0
    %3298 = vmatpush1.bf16.msra.mxu0 %v3195
    %3299 = vmatprep.subr.bf16.mxu0 0
    %3300 = vmatpush1.bf16.msra.mxu0 %v3196
    %3301 = vmatprep.mubr.bf16.mxu0 %v2965
    %3302 = vmatmul.mubr.bf16.gmra.mrb[0].mxu0 %v2964
    %v3303 = vpop.f32.mrb[0].mxu0
    %v3304 = vadd.f32 %v3264, %v3303
    %v3305 = vpop.f32.mrb[0].mxu0
    %v3306 = vpop.f32.mrb[0].mxu0
    %v3307 = vpop.f32.mrb[0].mxu0
    %3308 = vdwg.mxu0
    %v3309 = vmax.f32 %v3304, 0.0
    %v3310 = vpack.c.bf16 %v3309, %v3309
    %v3311 = vld [vmem:[%s7] sm:$0xf]
    %v3312 = vld [vmem:[%s7 + $0x4] sm:$0xf]
    %v3313 = vld [vmem:[%s7 + $0x8] sm:$0xf]
    %v3314 = vld [vmem:[%s7 + $0xc] sm:$0xf]
    %v3315 = vld [vmem:[%s7 + $0x10] sm:$0xf]
    %v3316 = vld [vmem:[%s7 + $0x14] sm:$0xf]
    %v3317 = vld [vmem:[%s7 + $0x18] sm:$0xf]
    %v3318 = vld [vmem:[%s7 + $0x1c] sm:$0xf]
    %v3319 = vld [vmem:[%s7 + $0x20] sm:$0xf]
    %v3320 = vld [vmem:[%s7 + $0x24] sm:$0xf]
    %v3321 = vld [vmem:[%s7 + $0x28] sm:$0xf]
    %v3322 = vld [vmem:[%s7 + $0x2c] sm:$0xf]
    %v3323 = vld [vmem:[%s7 + $0x30] sm:$0xf]
    %v3324 = vld [vmem:[%s7 + $0x34] sm:$0xf]
    %v3325 = vld [vmem:[%s7 + $0x38] sm:$0xf]
    %v3326 = vld [vmem:[%s7 + $0x3c] sm:$0xf]
    %v3327 = vld [vmem:[%s8] sm:$0x1]
    %v3329 = vlaneseq
    %v3330 = vshrl.u32 %v3329, 7
    %v3331 = vsub.s32 0, %v3330
    %v3332 = vrot.slane %v3327, %v3331
    %v3350 = vunpack.c.l.b16 %v3311
    %v3351 = vunpack.c.l.b16 %v3312
    %v3352 = vunpack.c.l.b16 %v3313
    %v3353 = vunpack.c.l.b16 %v3314
    %v3354 = vunpack.c.l.b16 %v3315
    %v3355 = vunpack.c.l.b16 %v3316
    %v3356 = vunpack.c.l.b16 %v3317
    %v3357 = vunpack.c.l.b16 %v3318
    %v3358 = vunpack.c.l.b16 %v3319
    %v3359 = vunpack.c.l.b16 %v3320
    %v3360 = vunpack.c.l.b16 %v3321
    %v3361 = vunpack.c.l.b16 %v3322
    %v3362 = vunpack.c.l.b16 %v3323
    %v3363 = vunpack.c.l.b16 %v3324
    %v3364 = vunpack.c.l.b16 %v3325
    %v3365 = vunpack.c.l.b16 %v3326
    %v3366 = vpack.c.b16 %v3351, %v3350
    %v3367 = vpack.c.b16 %v3353, %v3352
    %v3368 = vpack.c.b16 %v3355, %v3354
    %v3369 = vpack.c.b16 %v3357, %v3356
    %v3370 = vpack.c.b16 %v3359, %v3358
    %v3371 = vpack.c.b16 %v3361, %v3360
    %v3372 = vpack.c.b16 %v3363, %v3362
    %v3373 = vpack.c.b16 %v3365, %v3364
    %3382 = vmatprep.subr.bf16.mxu0 0
    %3383 = vmatpush1.bf16.msra.mxu0 %v3366
    %3384 = vmatprep.subr.bf16.mxu0 0
    %3385 = vmatpush1.bf16.msra.mxu0 %v3367
    %3386 = vmatprep.subr.bf16.mxu0 0
    %3387 = vmatpush1.bf16.msra.mxu0 %v3368
    %3388 = vmatprep.subr.bf16.mxu0 0
    %3389 = vmatpush1.bf16.msra.mxu0 %v3369
    %3390 = vmatprep.subr.bf16.mxu0 0
    %3391 = vmatpush1.bf16.msra.mxu0 %v3370
    %3392 = vmatprep.subr.bf16.mxu0 0
    %3393 = vmatpush1.bf16.msra.mxu0 %v3371
    %3394 = vmatprep.subr.bf16.mxu0 0
    %3395 = vmatpush1.bf16.msra.mxu0 %v3372
    %3396 = vmatprep.subr.bf16.mxu0 0
    %3397 = vmatpush1.bf16.msra.mxu0 %v3373
    %3398 = vmatprep.subr.bf16.mxu0 0
    %3399 = vmatpush1.bf16.msra.mxu0 0
    %3400 = vmatprep.subr.bf16.mxu0 0
    %3401 = vmatpush1.bf16.msra.mxu0 0
    %3402 = vmatprep.subr.bf16.mxu0 0
    %3403 = vmatpush1.bf16.msra.mxu0 0
    %3404 = vmatprep.subr.bf16.mxu0 0
    %3405 = vmatpush1.bf16.msra.mxu0 0
    %3406 = vmatprep.subr.bf16.mxu0 0
    %3407 = vmatpush1.bf16.msra.mxu0 0
    %3408 = vmatprep.subr.bf16.mxu0 0
    %3409 = vmatpush1.bf16.msra.mxu0 0
    %3410 = vmatprep.subr.bf16.mxu0 0
    %3411 = vmatpush1.bf16.msra.mxu0 0
    %3412 = vmatprep.subr.bf16.mxu0 0
    %3413 = vmatpush1.bf16.msra.mxu0 0
    %3414 = vmatprep.mubr.bf16.mxu0 0
    %3415 = vmatmul.mubr.bf16.gmra.mrb[0].mxu0 %v3310
    %v3416 = vpop.f32.mrb[0].mxu0
    %v3417 = vadd.f32 %v3332, %v3416
    %v3418 = vpop.f32.mrb[0].mxu0
    %v3419 = vpop.f32.mrb[0].mxu0
    %v3420 = vpop.f32.mrb[0].mxu0
    %3421 = vdwg.mxu0
    %v3422 = vxor.u32 %v3417, 2147483648
    %v3423 = vmul.f32 %v3422, 1.442695
    %v3424 = vpow.pop %v3423
    %v3425 = vadd.f32 %v3424, 1.0
    %v3426 = vrcp.pop %v3425
    %v3427 = vmul.f32 1.0, %v3426
    %vm3428 = vcmask 15360
    %3429 = vst.msk [vmem:[%s9] sm:$0xff] %vm3428, %v3427
    // Predicated region
    $region50: #{tpu_custom_call.1} parent=1 // pred_check
      _
    $region51: #{tpu_custom_call.1} parent=1 // pred_check_branch
      %3431 = sbr.rel (0) target = $region53
    $region52: #{tpu_custom_call.1} parent=1 // pred_region
      _
    $region53: #{tpu_custom_call.1} parent=1 // pred_fallthru
      _
    // Predicated region
    $region54: #{tpu_custom_call.1} parent=1 // pred_check
      _
    $region55: #{tpu_custom_call.1} parent=1 // pred_check_branch
      %3433 = sbr.rel (0) target = $region57
    $region56: #{tpu_custom_call.1} parent=1 // pred_region
      _
    $region57: #{tpu_custom_call.1} parent=1 // pred_fallthru
      _
    %3434 = vsyncpa [#allocation3], 1
    %3435 = vsyncpa [#allocation5], 1

</llo_original>
